<compile_context>
chip_gen: v6e
topology: v6e:2x2x1
jax: 0.10.0
libtpu: 0.0.40
codegen_flags: <defaults>
</compile_context>

<pallas_src>
import functools

import numpy as np
import jax
import jax.numpy as jnp
from jax.experimental import pallas as pl
from jax.experimental.pallas import tpu as pltpu


# -----------------------------------------------------------------------------
# Pallas kernel: the full SAM forward for one batch element.
# -----------------------------------------------------------------------------
def _sam_kernel(num_s, norm_scale,
                x_ref, e_ref, mt_ref,
                wsp_ref, bsp_ref,
                w1_ref, b1_ref, w2_ref, we_ref,
                o_ref):
    """All tensors are channel-major: (channels, H*W) with pixels on lanes.

    x_ref  : (1, C, HW)       input feature map
    e_ref  : (1, Ce, HW)      edge logits (softmax over Ce, channel 1 is used)
    mt_ref : (N, HW)          constant adaptive-avg-pool matrix (interior bins)
    wsp    : (2S, C)          fused [conv_state; conv_proj] 1x1 weights
    bsp    : (2S, 1)          fused biases
    w1/b1  : (N, N), (1, N)   GCN conv1 (over node dim)
    w2     : (S, S)           GCN conv2 (over state dim, no bias)
    we     : (C, S)           conv_extend 1x1 (no bias)
    o_ref  : (1, C, HW)
    """
    x = x_ref[0]                                                    # (C, HW)
    edge = e_ref[0]                                                 # (Ce, HW)

    # softmax(edge, dim=channel)[1] -> guiding map (1, HW)
    emax = jnp.max(edge, axis=0, keepdims=True)
    ee = jnp.exp(edge - emax)
    guide = ee[1:2, :] / jnp.sum(ee, axis=0, keepdims=True)         # (1, HW)

    # Fused conv_state / conv_proj 1x1: one (2S, C) @ (C, HW) matmul.
    sp = jnp.dot(wsp_ref[...], x,
                 preferred_element_type=jnp.float32) + bsp_ref[...]  # (2S, HW)
    state = sp[:num_s]                                               # (S, HW)
    proj = sp[num_s:]                                                # (S, HW)
    mask = proj * guide                                              # (S, HW)

    # Adaptive avg-pool (interior mids x mids bins) as one matmul contracting
    # the lane (pixel) axis of both operands: (S, HW) . (N, HW)^T -> (S, N).
    anchor = jax.lax.dot_general(mask, mt_ref[...], (((1,), (1,)), ((), ())),
                                 preferred_element_type=jnp.float32)  # (S, N)

    # x_proj_reshaped[node, pix] = sum_s anchor[s, node] * proj[s, pix]
    proj_r = jax.lax.dot_general(anchor, proj, (((0,), (0,)), ((), ())),
                                 preferred_element_type=jnp.float32)  # (N, HW)
    # softmax over the node dim (PyTorch dim=1 of (n, N, HW))
    proj_r = proj_r - jnp.max(proj_r, axis=0, keepdims=True)
    proj_r = jnp.exp(proj_r)
    proj_r = proj_r / jnp.sum(proj_r, axis=0, keepdims=True)

    # x_n_state[s, node] = sum_pix state[s, pix] * proj_r[node, pix]
    xns = jax.lax.dot_general(state, proj_r, (((1,), (1,)), ((), ())),
                              preferred_element_type=jnp.float32)     # (S, N)
    if norm_scale is not None:
        xns = xns * norm_scale

    # GCN: h = xns @ W1^T + b1 ; h = h - xns ; relu(W2 @ h)
    h = jax.lax.dot_general(xns, w1_ref[...], (((1,), (1,)), ((), ())),
                            preferred_element_type=jnp.float32) + b1_ref[...]
    h = h - xns
    rel = jnp.maximum(jnp.dot(w2_ref[...], h,
                              preferred_element_type=jnp.float32), 0.0)  # (S, N)

    # Back-project: (S, N) @ (N, HW) -> (S, HW)
    xsn = jnp.dot(rel, proj_r, preferred_element_type=jnp.float32)       # (S, HW)

    # conv_extend + residual: (C, S) @ (S, HW) -> (C, HW)
    o_ref[0] = (x + jnp.dot(we_ref[...], xsn,
                            preferred_element_type=jnp.float32)).astype(o_ref.dtype)


# -----------------------------------------------------------------------------
# Host-side helpers
# -----------------------------------------------------------------------------
def _adaptive_bins(size, out_sz):
    """PyTorch AdaptiveAvgPool2d bin boundaries."""
    return [((i * size) // out_sz, -((-(i + 1) * size) // out_sz))
            for i in range(out_sz)]


def _interior_pool_matrix(h, w, mids):
    """(mids*mids, h*w) matrix M with M[node, pix] = 1/|bin| over the interior
    bins of AdaptiveAvgPool2d((mids+2, mids+2)) (i.e. the [1:-1, 1:-1] crop)."""
    out_sz = mids + 2
    hb = _adaptive_bins(h, out_sz)
    wb = _adaptive_bins(w, out_sz)
    m = np.zeros((mids * mids, h * w), np.float32)
    for bi, i in enumerate(range(1, out_sz - 1)):
        hs, he = hb[i]
        for bj, j in enumerate(range(1, out_sz - 1)):
            ws_, we_ = wb[j]
            cnt = float((he - hs) * (we_ - ws_))
            for y in range(hs, he):
                m[bi * mids + bj, y * w + ws_: y * w + we_] = 1.0 / cnt
    return jnp.asarray(m)                                            # (N, HW)


def _nearest_resize(edge, h, w):
    """F.upsample default (mode='nearest') to spatial size (h, w)."""
    eh, ew = edge.shape[2], edge.shape[3]
    if (eh, ew) == (h, w):
        return edge
    ri = (jnp.arange(h) * eh) // h
    ci = (jnp.arange(w) * ew) // w
    return edge[:, :, ri, :][:, :, :, ci]


def sam_forward_pallas(params, x, edge, *, mids=4, normalize=False):
    n, c, h, w = x.shape
    hw = h * w
    S = params["ws"].shape[0]
    N = mids * mids

    edge = _nearest_resize(edge, h, w)
    ce = edge.shape[1]

    xf = x.reshape(n, c, hw).astype(jnp.float32)
    ef = edge.reshape(n, ce, hw).astype(jnp.float32)
    mt = _interior_pool_matrix(h, w, mids)                           # (N, HW)

    # Fuse conv_state / conv_proj weights so the kernel does one matmul.
    wsp = jnp.concatenate([params["ws"], params["wp"]], axis=0)      # (2S, C)
    bsp = jnp.concatenate([params["bs"], params["bp"]], axis=0).reshape(2 * S, 1)

    norm_scale = (1.0 / float(hw)) if normalize else None
    kernel = functools.partial(_sam_kernel, S, norm_scale)

    out = pl.pallas_call(
        kernel,
        out_shape=jax.ShapeDtypeStruct((n, c, hw), jnp.float32),
        grid=(n,),
        in_specs=[
            pl.BlockSpec((1, c, hw), lambda b: (b, 0, 0)),           # x
            pl.BlockSpec((1, ce, hw), lambda b: (b, 0, 0)),          # edge logits
            pl.BlockSpec((N, hw), lambda b: (0, 0)),                 # pool matrix
            pl.BlockSpec((2 * S, c), lambda b: (0, 0)),              # wsp
            pl.BlockSpec((2 * S, 1), lambda b: (0, 0)),              # bsp
            pl.BlockSpec((N, N), lambda b: (0, 0)),                  # w1
            pl.BlockSpec((1, N), lambda b: (0, 0)),                  # b1
            pl.BlockSpec((S, S), lambda b: (0, 0)),                  # w2
            pl.BlockSpec((c, S), lambda b: (0, 0)),                  # we
        ],
        out_specs=pl.BlockSpec((1, c, hw), lambda b: (b, 0, 0)),
        compiler_params=pltpu.CompilerParams(
            dimension_semantics=("parallel",)),
    )(xf, ef, mt,
      wsp, bsp,
      params["w1"], params["b1"].reshape(1, N),
      params["w2"], params["we"])

    return out.reshape(n, c, h, w)


# -----------------------------------------------------------------------------
# Plain-JAX reference (mirrors the PyTorch SAM forward, NCHW) for validation.
# -----------------------------------------------------------------------------
def sam_reference(params, x, edge, *, mids=4, normalize=False):
    n, c, h, w = x.shape
    S = params["ws"].shape[0]

    edge = _nearest_resize(edge, h, w)
    edge_sm = jax.nn.softmax(edge, axis=1)[:, 1:2]                       # (n,1,h,w)

    state = jnp.einsum("sc,nchw->nshw", params["ws"], x) \
        + params["bs"][None, :, None, None]
    proj = jnp.einsum("sc,nchw->nshw", params["wp"], x) \
        + params["bp"][None, :, None, None]
    mask = proj * edge_sm

    out_sz = mids + 2
    hb = _adaptive_bins(h, out_sz)
    wb = _adaptive_bins(w, out_sz)
    rows = []
    for i in range(1, out_sz - 1):
        cols = []
        for j in range(1, out_sz - 1):
            hs, he = hb[i]
            ws_, we_ = wb[j]
            cols.append(jnp.mean(mask[:, :, hs:he, ws_:we_], axis=(2, 3)))
        rows.append(jnp.stack(cols, axis=-1))
    x_anchor = jnp.stack(rows, axis=-2).reshape(n, S, mids * mids)       # (n,S,N)

    state_r = state.reshape(n, S, h * w)
    proj_r_in = proj.reshape(n, S, h * w)

    pr = jnp.einsum("nsk,nsp->nkp", x_anchor, proj_r_in)                 # (n,N,HW)
    pr = jax.nn.softmax(pr, axis=1)

    xns = jnp.einsum("nsp,nkp->nsk", state_r, pr)                        # (n,S,N)
    if normalize:
        xns = xns * (1.0 / (h * w))

    hgc = jnp.einsum("oi,nsi->nso", params["w1"], xns) \
        + params["b1"][None, None, :]
    hgc = hgc - xns
    rel = jax.nn.relu(jnp.einsum("os,nsk->nok", params["w2"], hgc))      # (n,S,N)

    xsr = jnp.einsum("nsk,nkp->nsp", rel, pr).reshape(n, S, h, w)
    return x + jnp.einsum("cs,nshw->nchw", params["we"], xsr)


# -----------------------------------------------------------------------------
# Parameter init (deterministic)
# -----------------------------------------------------------------------------
def init_sam_params(key, num_in=32, plane_mid=16, mids=4):
    S, N = plane_mid, mids * mids
    ks = jax.random.split(key, 8)

    def lin(k, o, i):
        return jax.random.normal(k, (o, i), jnp.float32) / jnp.sqrt(float(i))

    return dict(
        ws=lin(ks[0], S, num_in),
        bs=0.1 * jax.random.normal(ks[1], (S,), jnp.float32),
        wp=lin(ks[2], S, num_in),
        bp=0.1 * jax.random.normal(ks[3], (S,), jnp.float32),
        w1=lin(ks[4], N, N),
        b1=0.1 * jax.random.normal(ks[5], (N,), jnp.float32),
        w2=lin(ks[6], S, S),
        we=lin(ks[7], num_in, S),
    )


if __name__ == "__main__":
    key = jax.random.PRNGKey(0)
    kp, kx, ke = jax.random.split(key, 3)

    num_in, plane_mid, mids = 32, 16, 4
    params = init_sam_params(kp, num_in=num_in, plane_mid=plane_mid, mids=mids)

    # Small shapes consistent with the module: x (B, 32, 16, 16), 2-channel
    # edge logits at half resolution (exercises the nearest upsample).
    x = jax.random.normal(kx, (2, num_in, 16, 16), jnp.float32)
    edge = jax.random.normal(ke, (2, 2, 8, 8), jnp.float32)

    fwd = jax.jit(functools.partial(sam_forward_pallas, params))
    out = fwd(x, edge)
    jax.block_until_ready(out)

    assert out.shape == x.shape
    assert bool(jnp.all(jnp.isfinite(out)))

    ref = sam_reference(params, x, edge)
    err = float(jnp.max(jnp.abs(out - ref)))
    tol = 1e-3 * (1.0 + float(jnp.max(jnp.abs(ref))))
    assert err <= tol, f"mismatch vs reference: max abs err {err} > {tol}"

    print("KERNEL_OK")
</pallas_src>

<mosaic_0001>
module attributes {stable_mosaic.version = 11 : i64} {
  func.func @_sam_kernel(%arg0: i32, %arg1: memref<1x32x256xf32, #tpu.memory_space<vmem>>, %arg2: memref<1x2x256xf32, #tpu.memory_space<vmem>>, %arg3: memref<16x256xf32, #tpu.memory_space<vmem>>, %arg4: memref<32x32xf32, #tpu.memory_space<vmem>>, %arg5: memref<32x1xf32, #tpu.memory_space<vmem>>, %arg6: memref<16x16xf32, #tpu.memory_space<vmem>>, %arg7: memref<1x16xf32, #tpu.memory_space<vmem>>, %arg8: memref<16x16xf32, #tpu.memory_space<vmem>>, %arg9: memref<32x16xf32, #tpu.memory_space<vmem>>, %arg10: memref<1x32x256xf32, #tpu.memory_space<vmem>>) attributes {dimension_semantics = [#tpu.dimension_semantics<parallel>], iteration_bounds = array<i64: 2>, scalar_prefetch = 0 : i64, scratch_operands = 0 : i64, tpu.core_type = #tpu.core_type<tc>, window_params = [{transform_indices = @transform_0, window_bounds = array<i64: 1, 32, 256>}, {transform_indices = @transform_1, window_bounds = array<i64: 1, 2, 256>}, {pipeline_mode = #tpu.pipeline_mode<synchronous>, transform_indices = @transform_2, window_bounds = array<i64: 16, 256>}, {pipeline_mode = #tpu.pipeline_mode<synchronous>, transform_indices = @transform_3, window_bounds = array<i64: 32, 32>}, {pipeline_mode = #tpu.pipeline_mode<synchronous>, transform_indices = @transform_4, window_bounds = array<i64: 32, 1>}, {pipeline_mode = #tpu.pipeline_mode<synchronous>, transform_indices = @transform_5, window_bounds = array<i64: 16, 16>}, {pipeline_mode = #tpu.pipeline_mode<synchronous>, transform_indices = @transform_6, window_bounds = array<i64: 1, 16>}, {pipeline_mode = #tpu.pipeline_mode<synchronous>, transform_indices = @transform_7, window_bounds = array<i64: 16, 16>}, {pipeline_mode = #tpu.pipeline_mode<synchronous>, transform_indices = @transform_8, window_bounds = array<i64: 32, 16>}, {transform_indices = @transform_9, window_bounds = array<i64: 1, 32, 256>}]} {
    %c0 = arith.constant 0 : index
    %c0_0 = arith.constant 0 : index
    %c0_1 = arith.constant 0 : index
    %0 = vector.load %arg1[%c0, %c0_0, %c0_1] : memref<1x32x256xf32, #tpu.memory_space<vmem>>, vector<1x32x256xf32>
    %1 = vector.shape_cast %0 : vector<1x32x256xf32> to vector<32x256xf32>
    %c0_2 = arith.constant 0 : index
    %c0_3 = arith.constant 0 : index
    %c0_4 = arith.constant 0 : index
    %2 = vector.load %arg2[%c0_2, %c0_3, %c0_4] : memref<1x2x256xf32, #tpu.memory_space<vmem>>, vector<1x2x256xf32>
    %3 = vector.shape_cast %2 : vector<1x2x256xf32> to vector<2x256xf32>
    %cst = arith.constant dense<0xFF800000> : vector<256xf32>
    %4 = vector.multi_reduction <maximumf>, %3, %cst [0] : vector<2x256xf32> to vector<256xf32>
    %5 = vector.shape_cast %4 : vector<256xf32> to vector<1x256xf32>
    %6 = vector.broadcast %5 : vector<1x256xf32> to vector<2x256xf32>
    %7 = arith.subf %3, %6 : vector<2x256xf32>
    %8 = math.exp %7 : vector<2x256xf32>
    %9 = vector.extract_strided_slice %8 {offsets = [1, 0], sizes = [1, 256], strides = [1, 1]} : vector<2x256xf32> to vector<1x256xf32>
    %cst_5 = arith.constant dense<0.000000e+00> : vector<256xf32>
    %10 = vector.multi_reduction <add>, %8, %cst_5 [0] : vector<2x256xf32> to vector<256xf32>
    %11 = vector.shape_cast %10 : vector<256xf32> to vector<1x256xf32>
    %12 = arith.divf %9, %11 : vector<1x256xf32>
    %c0_6 = arith.constant 0 : index
    %c0_7 = arith.constant 0 : index
    %13 = vector.load %arg4[%c0_6, %c0_7] : memref<32x32xf32, #tpu.memory_space<vmem>>, vector<32x32xf32>
    %cst_8 = arith.constant dense<0.000000e+00> : vector<32x256xf32>
    %14 = tpu.matmul %13, %1, %cst_8 {dimension_numbers = #tpu.dot_dimension_numbers<[1], [0], [0], [1], [0, 0, 1, 1], [], []>} : vector<32x32xf32>, vector<32x256xf32>, vector<32x256xf32> -> vector<32x256xf32>
    %c0_9 = arith.constant 0 : index
    %c0_10 = arith.constant 0 : index
    %15 = vector.load %arg5[%c0_9, %c0_10] : memref<32x1xf32, #tpu.memory_space<vmem>>, vector<32x1xf32>
    %16 = vector.broadcast %15 : vector<32x1xf32> to vector<32x256xf32>
    %17 = arith.addf %14, %16 : vector<32x256xf32>
    %18 = vector.extract_strided_slice %17 {offsets = [0, 0], sizes = [16, 256], strides = [1, 1]} : vector<32x256xf32> to vector<16x256xf32>
    %19 = vector.extract_strided_slice %17 {offsets = [16, 0], sizes = [16, 256], strides = [1, 1]} : vector<32x256xf32> to vector<16x256xf32>
    %20 = vector.broadcast %12 : vector<1x256xf32> to vector<16x256xf32>
    %21 = arith.mulf %19, %20 : vector<16x256xf32>
    %c0_11 = arith.constant 0 : index
    %c0_12 = arith.constant 0 : index
    %22 = vector.load %arg3[%c0_11, %c0_12] : memref<16x256xf32, #tpu.memory_space<vmem>>, vector<16x256xf32>
    %cst_13 = arith.constant dense<0.000000e+00> : vector<16x16xf32>
    %23 = tpu.matmul %21, %22, %cst_13 {dimension_numbers = #tpu.dot_dimension_numbers<[1], [1], [0], [0], [0, 0, 1, 0], [], []>} : vector<16x256xf32>, vector<16x256xf32>, vector<16x16xf32> -> vector<16x16xf32>
    %cst_14 = arith.constant dense<0.000000e+00> : vector<16x256xf32>
    %24 = tpu.matmul %23, %19, %cst_14 {dimension_numbers = #tpu.dot_dimension_numbers<[0], [0], [1], [1], [0, 1, 1, 1], [], []>} : vector<16x16xf32>, vector<16x256xf32>, vector<16x256xf32> -> vector<16x256xf32>
    %cst_15 = arith.constant dense<0xFF800000> : vector<256xf32>
    %25 = vector.multi_reduction <maximumf>, %24, %cst_15 [0] : vector<16x256xf32> to vector<256xf32>
    %26 = vector.shape_cast %25 : vector<256xf32> to vector<1x256xf32>
    %27 = vector.broadcast %26 : vector<1x256xf32> to vector<16x256xf32>
    %28 = arith.subf %24, %27 : vector<16x256xf32>
    %29 = math.exp %28 : vector<16x256xf32>
    %cst_16 = arith.constant dense<0.000000e+00> : vector<256xf32>
    %30 = vector.multi_reduction <add>, %29, %cst_16 [0] : vector<16x256xf32> to vector<256xf32>
    %31 = vector.shape_cast %30 : vector<256xf32> to vector<1x256xf32>
    %32 = vector.broadcast %31 : vector<1x256xf32> to vector<16x256xf32>
    %33 = arith.divf %29, %32 : vector<16x256xf32>
    %cst_17 = arith.constant dense<0.000000e+00> : vector<16x16xf32>
    %34 = tpu.matmul %18, %33, %cst_17 {dimension_numbers = #tpu.dot_dimension_numbers<[1], [1], [0], [0], [0, 0, 1, 0], [], []>} : vector<16x256xf32>, vector<16x256xf32>, vector<16x16xf32> -> vector<16x16xf32>
    %c0_18 = arith.constant 0 : index
    %c0_19 = arith.constant 0 : index
    %35 = vector.load %arg6[%c0_18, %c0_19] : memref<16x16xf32, #tpu.memory_space<vmem>>, vector<16x16xf32>
    %cst_20 = arith.constant dense<0.000000e+00> : vector<16x16xf32>
    %36 = tpu.matmul %34, %35, %cst_20 {dimension_numbers = #tpu.dot_dimension_numbers<[1], [1], [0], [0], [0, 0, 1, 0], [], []>} : vector<16x16xf32>, vector<16x16xf32>, vector<16x16xf32> -> vector<16x16xf32>
    %c0_21 = arith.constant 0 : index
    %c0_22 = arith.constant 0 : index
    %37 = vector.load %arg7[%c0_21, %c0_22] : memref<1x16xf32, #tpu.memory_space<vmem>>, vector<1x16xf32>
    %38 = vector.broadcast %37 : vector<1x16xf32> to vector<16x16xf32>
    %39 = arith.addf %36, %38 : vector<16x16xf32>
    %40 = arith.subf %39, %34 : vector<16x16xf32>
    %c0_23 = arith.constant 0 : index
    %c0_24 = arith.constant 0 : index
    %41 = vector.load %arg8[%c0_23, %c0_24] : memref<16x16xf32, #tpu.memory_space<vmem>>, vector<16x16xf32>
    %cst_25 = arith.constant dense<0.000000e+00> : vector<16x16xf32>
    %42 = tpu.matmul %41, %40, %cst_25 {dimension_numbers = #tpu.dot_dimension_numbers<[1], [0], [0], [1], [0, 0, 1, 1], [], []>} : vector<16x16xf32>, vector<16x16xf32>, vector<16x16xf32> -> vector<16x16xf32>
    %cst_26 = arith.constant 0.000000e+00 : f32
    %43 = vector.broadcast %cst_26 : f32 to vector<16x16xf32>
    %44 = arith.maximumf %42, %43 : vector<16x16xf32>
    %cst_27 = arith.constant dense<0.000000e+00> : vector<16x256xf32>
    %45 = tpu.matmul %44, %33, %cst_27 {dimension_numbers = #tpu.dot_dimension_numbers<[1], [0], [0], [1], [0, 0, 1, 1], [], []>} : vector<16x16xf32>, vector<16x256xf32>, vector<16x256xf32> -> vector<16x256xf32>
    %c0_28 = arith.constant 0 : index
    %c0_29 = arith.constant 0 : index
    %46 = vector.load %arg9[%c0_28, %c0_29] : memref<32x16xf32, #tpu.memory_space<vmem>>, vector<32x16xf32>
    %cst_30 = arith.constant dense<0.000000e+00> : vector<32x256xf32>
    %47 = tpu.matmul %46, %45, %cst_30 {dimension_numbers = #tpu.dot_dimension_numbers<[1], [0], [0], [1], [0, 0, 1, 1], [], []>} : vector<32x16xf32>, vector<16x256xf32>, vector<32x256xf32> -> vector<32x256xf32>
    %48 = arith.addf %1, %47 : vector<32x256xf32>
    %c0_31 = arith.constant 0 : index
    %c0_32 = arith.constant 0 : index
    %c0_33 = arith.constant 0 : index
    %49 = vector.load %arg10[%c0_31, %c0_32, %c0_33] : memref<1x32x256xf32, #tpu.memory_space<vmem>>, vector<1x32x256xf32>
    %50 = vector.shape_cast %49 : vector<1x32x256xf32> to vector<32x256xf32>
    %51 = vector.shape_cast %48 : vector<32x256xf32> to vector<1x32x256xf32>
    tpu.vector_store %arg10[%c0_31, %c0_32, %c0_33], %51 {strides = array<i32>} : memref<1x32x256xf32, #tpu.memory_space<vmem>>, vector<1x32x256xf32>,
    return
  }
  func.func @transform_0(%arg0: i32) -> (i32, i32, i32) {
    %c0_i32 = arith.constant 0 : i32
    %c0_i32_0 = arith.constant 0 : i32
    %c0_i32_1 = arith.constant 0 : i32
    return %arg0, %c0_i32, %c0_i32_0 : i32, i32, i32
  }
  func.func @transform_1(%arg0: i32) -> (i32, i32, i32) {
    %c0_i32 = arith.constant 0 : i32
    %c0_i32_0 = arith.constant 0 : i32
    %c0_i32_1 = arith.constant 0 : i32
    return %arg0, %c0_i32, %c0_i32_0 : i32, i32, i32
  }
  func.func @transform_2(%arg0: i32) -> (i32, i32) {
    %c0_i32 = arith.constant 0 : i32
    %c0_i32_0 = arith.constant 0 : i32
    %c0_i32_1 = arith.constant 0 : i32
    return %c0_i32, %c0_i32_0 : i32, i32
  }
  func.func @transform_3(%arg0: i32) -> (i32, i32) {
    %c0_i32 = arith.constant 0 : i32
    %c0_i32_0 = arith.constant 0 : i32
    %c0_i32_1 = arith.constant 0 : i32
    return %c0_i32, %c0_i32_0 : i32, i32
  }
  func.func @transform_4(%arg0: i32) -> (i32, i32) {
    %c0_i32 = arith.constant 0 : i32
    %c0_i32_0 = arith.constant 0 : i32
    %c0_i32_1 = arith.constant 0 : i32
    return %c0_i32, %c0_i32_0 : i32, i32
  }
  func.func @transform_5(%arg0: i32) -> (i32, i32) {
    %c0_i32 = arith.constant 0 : i32
    %c0_i32_0 = arith.constant 0 : i32
    %c0_i32_1 = arith.constant 0 : i32
    return %c0_i32, %c0_i32_0 : i32, i32
  }
  func.func @transform_6(%arg0: i32) -> (i32, i32) {
    %c0_i32 = arith.constant 0 : i32
    %c0_i32_0 = arith.constant 0 : i32
    %c0_i32_1 = arith.constant 0 : i32
    return %c0_i32, %c0_i32_0 : i32, i32
  }
  func.func @transform_7(%arg0: i32) -> (i32, i32) {
    %c0_i32 = arith.constant 0 : i32
    %c0_i32_0 = arith.constant 0 : i32
    %c0_i32_1 = arith.constant 0 : i32
    return %c0_i32, %c0_i32_0 : i32, i32
  }
  func.func @transform_8(%arg0: i32) -> (i32, i32) {
    %c0_i32 = arith.constant 0 : i32
    %c0_i32_0 = arith.constant 0 : i32
    %c0_i32_1 = arith.constant 0 : i32
    return %c0_i32, %c0_i32_0 : i32, i32
  }
  func.func @transform_9(%arg0: i32) -> (i32, i32, i32) {
    %c0_i32 = arith.constant 0 : i32
    %c0_i32_0 = arith.constant 0 : i32
    %c0_i32_1 = arith.constant 0 : i32
    return %arg0, %c0_i32, %c0_i32_0 : i32, i32, i32
  }
}

</mosaic_0001>

<llo_original>
// kernel: sam_forward_pallas.1
$region0: #{sam_forward_pallas.1}
  #allocation0 [shape = 'u32[]', space=smem, size = 0x4, offset = 0x4, fixed_abs, tag = 'smem constant byte address 0x4 - core index']
  #allocation1 [shape = 'u32[144,128]{1,0:T(1,128)}', space=vmem, size = 0x12000, scoped, tag = 'internal scratch']
  %s0 = inlined_call_operand.vmem [shape: f32[2,32,256], index: 0, kind: input, shape index: {}]
  %s1 = inlined_call_operand.vmem [shape: f32[2,2,256], index: 1, kind: input, shape index: {}]
  %s2 = inlined_call_operand.vmem [shape: f32[16,256], index: 2, kind: input, shape index: {}]
  %s3 = inlined_call_operand.vmem [shape: f32[32,32], index: 3, kind: input, shape index: {}]
  %s4 = inlined_call_operand.vmem [shape: f32[32,1], index: 4, kind: input, shape index: {}]
  %s5 = inlined_call_operand.vmem [shape: f32[16,16], index: 5, kind: input, shape index: {}]
  %s6 = inlined_call_operand.vmem [shape: f32[1,16], index: 6, kind: input, shape index: {}]
  %s7 = inlined_call_operand.vmem [shape: f32[16,16], index: 7, kind: input, shape index: {}]
  %s8 = inlined_call_operand.vmem [shape: f32[32,16], index: 8, kind: input, shape index: {}]
  %s9 = inlined_call_operand.vmem [shape: f32[2,32,256], index: 9, kind: output, shape index: {}]
  %s10 = sld [smem:[#allocation0]]
  $region69: #{sam_forward_pallas.1} parent=0
    _
  %s12 = ssub.s32 1, %s10
  %s13 = scalar_select 0, %s12, %s10
  loop: start=0, step=1, limit=4
  $region2: #{sam_forward_pallas.1} parent=0 // loop_pre_header
    _
  $region3: #{sam_forward_pallas.1} parent=0 // loop_header
    %s15 = sphi 0, %s19
    %p16 = scmp.ge.s32.totalorder %s15, 4
    %s25 = sphi 0, %s27
    %s28 = sphi 0, %s25
    %s29 = sphi 0, %s28
    %s45 = sphi 0, %s29
    %s51 = sphi 0, %s53
    %s54 = sphi 0, %s51
    %s55 = sphi 0, %s54
    %s71 = sphi 0, %s55
    %s75 = sphi 0, %s75
    %s77 = sphi 0, %s75
    %s78 = sphi 0, %s77
    %s92 = sphi 0, %s78
    %s96 = sphi 0, %s96
    %s98 = sphi 0, %s96
    %s99 = sphi 0, %s98
    %s113 = sphi 0, %s99
    %s117 = sphi 0, %s117
    %s119 = sphi 0, %s117
    %s120 = sphi 0, %s119
    %s134 = sphi 0, %s120
    %s138 = sphi 0, %s138
    %s140 = sphi 0, %s138
    %s141 = sphi 0, %s140
    %s155 = sphi 0, %s141
    %s159 = sphi 0, %s159
    %s161 = sphi 0, %s159
    %s162 = sphi 0, %s161
    %s176 = sphi 0, %s162
    %s180 = sphi 0, %s180
    %s182 = sphi 0, %s180
    %s183 = sphi 0, %s182
    %s197 = sphi 0, %s183
    %s201 = sphi 0, %s201
    %s203 = sphi 0, %s201
    %s204 = sphi 0, %s203
    %s218 = sphi 0, %s204
    %s224 = sphi 0, %s226
    %s227 = sphi 0, %s224
    %s228 = sphi 0, %s227
    %s244 = sphi 0, %s228
  $region4: #{sam_forward_pallas.1} parent=0 // loop_header_branch
    %18 = sbr.rel (%p16) target = $region8
  $region5: #{sam_forward_pallas.1} parent=0 // loop_body
    %s20 = ssub.s32 %s15, 1
    %s21 = ssub.s32 %s15, 2
    %s22 = sadd.s32 %s15, 1
    %s23 = ssub.s32 %s15, %s22
    %p24 = scmp.eq.s32.totalorder %s23, 0
    %s26 = sadd.s32 %s25, 1
    %s27 = scalar_select %p24, %s25, %s26
    %p30 = pneg %p24
    %p31 = scmp.eq.s32.totalorder %s15, 1
    %p32 = por %p30, %p31
    %p33 = scmp.ne.s32.totalorder %s25, %s28
    %p34 = scmp.eq.s32.totalorder %s15, 0
    %p35 = por %p33, %p34
    %p36 = scmp.ne.s32.totalorder %s25, %s28
    %p37 = scmp.eq.s32.totalorder %s20, 1
    %p38 = por %p36, %p37
    %p39 = scmp.ne.s32.totalorder %s28, %s29
    %p40 = scmp.eq.s32.totalorder %s20, 0
    %p41 = por %p39, %p40
    %p42 = scmp.ne.s32.totalorder %s28, %s29
    %p43 = scmp.eq.s32.totalorder %s21, 1
    %p44 = por %p42, %p43
    %p46 = scmp.ne.s32.totalorder %s29, %s45
    %p47 = scmp.eq.s32.totalorder %s21, 0
    %p48 = por %p46, %p47
    %s49 = ssub.s32 %s15, %s22
    %p50 = scmp.eq.s32.totalorder %s49, 0
    %s52 = sadd.s32 %s51, 1
    %s53 = scalar_select %p50, %s51, %s52
    %p56 = pneg %p50
    %p57 = scmp.eq.s32.totalorder %s15, 1
    %p58 = por %p56, %p57
    %p59 = scmp.ne.s32.totalorder %s51, %s54
    %p60 = scmp.eq.s32.totalorder %s15, 0
    %p61 = por %p59, %p60
    %p62 = scmp.ne.s32.totalorder %s51, %s54
    %p63 = scmp.eq.s32.totalorder %s20, 1
    %p64 = por %p62, %p63
    %p65 = scmp.ne.s32.totalorder %s54, %s55
    %p66 = scmp.eq.s32.totalorder %s20, 0
    %p67 = por %p65, %p66
    %p68 = scmp.ne.s32.totalorder %s54, %s55
    %p69 = scmp.eq.s32.totalorder %s21, 1
    %p70 = por %p68, %p69
    %p72 = scmp.ne.s32.totalorder %s55, %s71
    %p73 = scmp.eq.s32.totalorder %s21, 0
    %p74 = por %p72, %p73
    %s76 = sadd.s32 %s75, 1
    %p79 = scmp.eq.s32.totalorder %s15, 1
    %p80 = scmp.ne.s32.totalorder %s75, %s77
    %p81 = scmp.eq.s32.totalorder %s15, 0
    %p82 = por %p80, %p81
    %p83 = scmp.ne.s32.totalorder %s75, %s77
    %p84 = scmp.eq.s32.totalorder %s20, 1
    %p85 = por %p83, %p84
    %p86 = scmp.ne.s32.totalorder %s77, %s78
    %p87 = scmp.eq.s32.totalorder %s20, 0
    %p88 = por %p86, %p87
    %p89 = scmp.ne.s32.totalorder %s77, %s78
    %p90 = scmp.eq.s32.totalorder %s21, 1
    %p91 = por %p89, %p90
    %p93 = scmp.ne.s32.totalorder %s78, %s92
    %p94 = scmp.eq.s32.totalorder %s21, 0
    %p95 = por %p93, %p94
    %s97 = sadd.s32 %s96, 1
    %p100 = scmp.eq.s32.totalorder %s15, 1
    %p101 = scmp.ne.s32.totalorder %s96, %s98
    %p102 = scmp.eq.s32.totalorder %s15, 0
    %p103 = por %p101, %p102
    %p104 = scmp.ne.s32.totalorder %s96, %s98
    %p105 = scmp.eq.s32.totalorder %s20, 1
    %p106 = por %p104, %p105
    %p107 = scmp.ne.s32.totalorder %s98, %s99
    %p108 = scmp.eq.s32.totalorder %s20, 0
    %p109 = por %p107, %p108
    %p110 = scmp.ne.s32.totalorder %s98, %s99
    %p111 = scmp.eq.s32.totalorder %s21, 1
    %p112 = por %p110, %p111
    %p114 = scmp.ne.s32.totalorder %s99, %s113
    %p115 = scmp.eq.s32.totalorder %s21, 0
    %p116 = por %p114, %p115
    %s118 = sadd.s32 %s117, 1
    %p121 = scmp.eq.s32.totalorder %s15, 1
    %p122 = scmp.ne.s32.totalorder %s117, %s119
    %p123 = scmp.eq.s32.totalorder %s15, 0
    %p124 = por %p122, %p123
    %p125 = scmp.ne.s32.totalorder %s117, %s119
    %p126 = scmp.eq.s32.totalorder %s20, 1
    %p127 = por %p125, %p126
    %p128 = scmp.ne.s32.totalorder %s119, %s120
    %p129 = scmp.eq.s32.totalorder %s20, 0
    %p130 = por %p128, %p129
    %p131 = scmp.ne.s32.totalorder %s119, %s120
    %p132 = scmp.eq.s32.totalorder %s21, 1
    %p133 = por %p131, %p132
    %p135 = scmp.ne.s32.totalorder %s120, %s134
    %p136 = scmp.eq.s32.totalorder %s21, 0
    %p137 = por %p135, %p136
    %s139 = sadd.s32 %s138, 1
    %p142 = scmp.eq.s32.totalorder %s15, 1
    %p143 = scmp.ne.s32.totalorder %s138, %s140
    %p144 = scmp.eq.s32.totalorder %s15, 0
    %p145 = por %p143, %p144
    %p146 = scmp.ne.s32.totalorder %s138, %s140
    %p147 = scmp.eq.s32.totalorder %s20, 1
    %p148 = por %p146, %p147
    %p149 = scmp.ne.s32.totalorder %s140, %s141
    %p150 = scmp.eq.s32.totalorder %s20, 0
    %p151 = por %p149, %p150
    %p152 = scmp.ne.s32.totalorder %s140, %s141
    %p153 = scmp.eq.s32.totalorder %s21, 1
    %p154 = por %p152, %p153
    %p156 = scmp.ne.s32.totalorder %s141, %s155
    %p157 = scmp.eq.s32.totalorder %s21, 0
    %p158 = por %p156, %p157
    %s160 = sadd.s32 %s159, 1
    %p163 = scmp.eq.s32.totalorder %s15, 1
    %p164 = scmp.ne.s32.totalorder %s159, %s161
    %p165 = scmp.eq.s32.totalorder %s15, 0
    %p166 = por %p164, %p165
    %p167 = scmp.ne.s32.totalorder %s159, %s161
    %p168 = scmp.eq.s32.totalorder %s20, 1
    %p169 = por %p167, %p168
    %p170 = scmp.ne.s32.totalorder %s161, %s162
    %p171 = scmp.eq.s32.totalorder %s20, 0
    %p172 = por %p170, %p171
    %p173 = scmp.ne.s32.totalorder %s161, %s162
    %p174 = scmp.eq.s32.totalorder %s21, 1
    %p175 = por %p173, %p174
    %p177 = scmp.ne.s32.totalorder %s162, %s176
    %p178 = scmp.eq.s32.totalorder %s21, 0
    %p179 = por %p177, %p178
    %s181 = sadd.s32 %s180, 1
    %p184 = scmp.eq.s32.totalorder %s15, 1
    %p185 = scmp.ne.s32.totalorder %s180, %s182
    %p186 = scmp.eq.s32.totalorder %s15, 0
    %p187 = por %p185, %p186
    %p188 = scmp.ne.s32.totalorder %s180, %s182
    %p189 = scmp.eq.s32.totalorder %s20, 1
    %p190 = por %p188, %p189
    %p191 = scmp.ne.s32.totalorder %s182, %s183
    %p192 = scmp.eq.s32.totalorder %s20, 0
    %p193 = por %p191, %p192
    %p194 = scmp.ne.s32.totalorder %s182, %s183
    %p195 = scmp.eq.s32.totalorder %s21, 1
    %p196 = por %p194, %p195
    %p198 = scmp.ne.s32.totalorder %s183, %s197
    %p199 = scmp.eq.s32.totalorder %s21, 0
    %p200 = por %p198, %p199
    %s202 = sadd.s32 %s201, 1
    %p205 = scmp.eq.s32.totalorder %s15, 1
    %p206 = scmp.ne.s32.totalorder %s201, %s203
    %p207 = scmp.eq.s32.totalorder %s15, 0
    %p208 = por %p206, %p207
    %p209 = scmp.ne.s32.totalorder %s201, %s203
    %p210 = scmp.eq.s32.totalorder %s20, 1
    %p211 = por %p209, %p210
    %p212 = scmp.ne.s32.totalorder %s203, %s204
    %p213 = scmp.eq.s32.totalorder %s20, 0
    %p214 = por %p212, %p213
    %p215 = scmp.ne.s32.totalorder %s203, %s204
    %p216 = scmp.eq.s32.totalorder %s21, 1
    %p217 = por %p215, %p216
    %p219 = scmp.ne.s32.totalorder %s204, %s218
    %p220 = scmp.eq.s32.totalorder %s21, 0
    %p221 = por %p219, %p220
    %s222 = ssub.s32 %s15, %s22
    %p223 = scmp.eq.s32.totalorder %s222, 0
    %s225 = sadd.s32 %s224, 1
    %s226 = scalar_select %p223, %s224, %s225
    %p229 = pneg %p223
    %p230 = scmp.eq.s32.totalorder %s15, 1
    %p231 = por %p229, %p230
    %p232 = scmp.ne.s32.totalorder %s224, %s227
    %p233 = scmp.eq.s32.totalorder %s15, 0
    %p234 = por %p232, %p233
    %p235 = scmp.ne.s32.totalorder %s224, %s227
    %p236 = scmp.eq.s32.totalorder %s20, 1
    %p237 = por %p235, %p236
    %p238 = scmp.ne.s32.totalorder %s227, %s228
    %p239 = scmp.eq.s32.totalorder %s20, 0
    %p240 = por %p238, %p239
    %p241 = scmp.ne.s32.totalorder %s227, %s228
    %p242 = scmp.eq.s32.totalorder %s21, 1
    %p243 = por %p241, %p242
    %p245 = scmp.ne.s32.totalorder %s228, %s244
    %p246 = scmp.eq.s32.totalorder %s21, 0
    %p247 = por %p245, %p246
    %p248 = scmp.le.s32.totalorder 1, %s15
    %p249 = scmp.lt.s32.totalorder %s15, 3
    %p250 = pnand %p248, %p249
    %p251 = pneg %p250
    // Predicated region
    $region9: #{sam_forward_pallas.1} parent=5 // pred_check
      _
    $region10: #{sam_forward_pallas.1} parent=5 // pred_check_branch
      %253 = sbr.rel (%p250) target = $region12
    $region11: #{sam_forward_pallas.1} parent=5 // pred_region
      %s254 = ssub.s32 %s15, 1
      // Predicated region
      $region13: #{sam_forward_pallas.1} parent=11 // pred_check
        %p255 = pneg %p88
      $region14: #{sam_forward_pallas.1} parent=11 // pred_check_branch
        %257 = sbr.rel (%p255) target = $region16
      $region15: #{sam_forward_pallas.1} parent=11 // pred_region
        _
      $region16: #{sam_forward_pallas.1} parent=11 // pred_fallthru
        _
      // Predicated region
      $region17: #{sam_forward_pallas.1} parent=11 // pred_check
        %p258 = pneg %p109
      $region18: #{sam_forward_pallas.1} parent=11 // pred_check_branch
        %260 = sbr.rel (%p258) target = $region20
      $region19: #{sam_forward_pallas.1} parent=11 // pred_region
        _
      $region20: #{sam_forward_pallas.1} parent=11 // pred_fallthru
        _
      // Predicated region
      $region21: #{sam_forward_pallas.1} parent=11 // pred_check
        %p261 = pneg %p130
      $region22: #{sam_forward_pallas.1} parent=11 // pred_check_branch
        %263 = sbr.rel (%p261) target = $region24
      $region23: #{sam_forward_pallas.1} parent=11 // pred_region
        _
      $region24: #{sam_forward_pallas.1} parent=11 // pred_fallthru
        _
      // Predicated region
      $region25: #{sam_forward_pallas.1} parent=11 // pred_check
        %p264 = pneg %p151
      $region26: #{sam_forward_pallas.1} parent=11 // pred_check_branch
        %266 = sbr.rel (%p264) target = $region28
      $region27: #{sam_forward_pallas.1} parent=11 // pred_region
        _
      $region28: #{sam_forward_pallas.1} parent=11 // pred_fallthru
        _
      // Predicated region
      $region29: #{sam_forward_pallas.1} parent=11 // pred_check
        %p267 = pneg %p172
      $region30: #{sam_forward_pallas.1} parent=11 // pred_check_branch
        %269 = sbr.rel (%p267) target = $region32
      $region31: #{sam_forward_pallas.1} parent=11 // pred_region
        _
      $region32: #{sam_forward_pallas.1} parent=11 // pred_fallthru
        _
      // Predicated region
      $region33: #{sam_forward_pallas.1} parent=11 // pred_check
        %p270 = pneg %p193
      $region34: #{sam_forward_pallas.1} parent=11 // pred_check_branch
        %272 = sbr.rel (%p270) target = $region36
      $region35: #{sam_forward_pallas.1} parent=11 // pred_region
        _
      $region36: #{sam_forward_pallas.1} parent=11 // pred_fallthru
        _
      // Predicated region
      $region37: #{sam_forward_pallas.1} parent=11 // pred_check
        %p273 = pneg %p214
      $region38: #{sam_forward_pallas.1} parent=11 // pred_check_branch
        %275 = sbr.rel (%p273) target = $region40
      $region39: #{sam_forward_pallas.1} parent=11 // pred_region
        _
      $region40: #{sam_forward_pallas.1} parent=11 // pred_fallthru
        _
    $region12: #{sam_forward_pallas.1} parent=5 // pred_fallthru
      _
    %p276 = scmp.lt.s32.totalorder %s15, 2
    // Predicated region
    $region41: #{sam_forward_pallas.1} parent=5 // pred_check
      %p277 = pneg %p276
    $region42: #{sam_forward_pallas.1} parent=5 // pred_check_branch
      %279 = sbr.rel (%p277) target = $region44
    $region43: #{sam_forward_pallas.1} parent=5 // pred_region
      // Predicated region
      $region45: #{sam_forward_pallas.1} parent=43 // pred_check
        %p280 = pneg %p35
      $region46: #{sam_forward_pallas.1} parent=43 // pred_check_branch
        %282 = sbr.rel (%p280) target = $region48
      $region47: #{sam_forward_pallas.1} parent=43 // pred_region
        %p283 = scmp.lt.s32.totalorder %s15, 1
        %s284 = scalar_select %p283, %s15, 1
        %s285 = smul.addr %s284, 8
        %s286 = smul.addr %s285, 8
        %s287 = scalar_lea.vmem %s0, %s286
      $region48: #{sam_forward_pallas.1} parent=43 // pred_fallthru
        _
      // Predicated region
      $region49: #{sam_forward_pallas.1} parent=43 // pred_check
        %p288 = pneg %p61
      $region50: #{sam_forward_pallas.1} parent=43 // pred_check_branch
        %290 = sbr.rel (%p288) target = $region52
      $region51: #{sam_forward_pallas.1} parent=43 // pred_region
        %p291 = scmp.lt.s32.totalorder %s15, 1
        %s292 = scalar_select %p291, %s15, 1
        %s293 = smul.addr %s292, 2
        %s294 = smul.addr %s293, 2
        %s295 = scalar_lea.vmem %s1, %s294
      $region52: #{sam_forward_pallas.1} parent=43 // pred_fallthru
        _
    $region44: #{sam_forward_pallas.1} parent=5 // pred_fallthru
      _
    %p296 = scmp.le.s32.totalorder 1, %s15
    %p297 = scmp.lt.s32.totalorder %s15, 3
    %p298 = pnand %p296, %p297
    %p299 = pneg %p298
    // Predicated region
    $region53: #{sam_forward_pallas.1} parent=5 // pred_check
      _
    $region54: #{sam_forward_pallas.1} parent=5 // pred_check_branch
      %301 = sbr.rel (%p298) target = $region56
    $region55: #{sam_forward_pallas.1} parent=5 // pred_region
      %s302 = ssub.s32 %s15, 1
      %p303 = scmp.lt.s32.totalorder %s20, 1
      %s304 = scalar_select %p303, %s20, 1
      %s305 = smul.addr %s304, 8
      %s306 = smul.addr %s305, 8
      %s307 = scalar_lea.vmem %s0, %s306
      %p308 = pneg %p41
      %p309 = pneg %p38
      %p310 = scmp.lt.s32.totalorder %s20, 1
      %s311 = scalar_select %p310, %s20, 1
      %s312 = smul.addr %s311, 2
      %s313 = smul.addr %s312, 2
      %s314 = scalar_lea.vmem %s1, %s313
      %p315 = pneg %p67
      %p316 = pneg %p64
      %p317 = pneg %p88
      %p318 = pneg %p85
      %p319 = pneg %p109
      %p320 = pneg %p106
      %p321 = pneg %p130
      %p322 = pneg %p127
      %p323 = pneg %p151
      %p324 = pneg %p148
      %p325 = pneg %p172
      %p326 = pneg %p169
      %p327 = pneg %p193
      %p328 = pneg %p190
      %p329 = pneg %p214
      %p330 = pneg %p211
      %p331 = pneg %p240
      %p332 = pneg %p237
      %p333 = scmp.lt.s32.totalorder %s20, 1
      %s334 = scalar_select %p333, %s20, 1
      %s335 = smul.addr %s334, 8
      %s336 = smul.addr %s335, 8
      %s337 = scalar_lea.vmem %s9, %s336
      %p338 = scmp.lt.s32.totalorder %s20, 1
      %s339 = scalar_select %p338, %s20, 1
      %s340 = smul.addr %s339, 8
      %s341 = smul.addr %s340, 8
      %s342 = scalar_lea.vmem %s0, %s341
      %p343 = scmp.lt.s32.totalorder %s20, 1
      %s344 = scalar_select %p343, %s20, 1
      %s345 = smul.addr %s344, 2
      %s346 = smul.addr %s345, 2
      %s347 = scalar_lea.vmem %s1, %s346
      %p348 = scmp.lt.s32.totalorder %s20, 1
      %s349 = scalar_select %p348, %s20, 1
      %s350 = smul.addr %s349, 8
      %s351 = smul.addr %s350, 8
      %s352 = scalar_lea.vmem %s9, %s351
      %v353 = vld [vmem:[%s342] sm:$0xff]
      %v354 = vld [vmem:[%s342 + $0x8] sm:$0xff]
      %v355 = vld [vmem:[%s342 + $0x10] sm:$0xff]
      %v356 = vld [vmem:[%s342 + $0x18] sm:$0xff]
      %v357 = vld [vmem:[%s342 + $0x20] sm:$0xff]
      %v358 = vld [vmem:[%s342 + $0x28] sm:$0xff]
      %v359 = vld [vmem:[%s342 + $0x30] sm:$0xff]
      %v360 = vld [vmem:[%s342 + $0x38] sm:$0xff]
      %v361 = vld [vmem:[%s347] sm:$0xf]
      %v364 = vunpack.c.l.s4 1983009808
      %v365 = vunpack.c.0.s8 %v364
      %v366 = vlaneseq
      %v367 = vshrl.u32 %v366, 7
      %v368 = vsub.s32 %v365, %v367
      %v369 = vrot.slane %v361, %v368
      %v370 = vcombine.high %v369, %v369
      %vm373 = vcmask 1041408
      %v374 = vsel %vm373, %v369, -inf
      %v375 = vrot.slane %v374, 4
      %v376 = vmax.f32 %v374, %v375
      %v377 = vrot.slane %v376, 2
      %v378 = vmax.f32 %v376, %v377
      %v379 = vrot.slane %v378, 1
      %v380 = vmax.f32 %v378, %v379
      %v381 = vsel %vm373, %v370, -inf
      %v382 = vrot.slane %v381, 4
      %v383 = vmax.f32 %v381, %v382
      %v384 = vrot.slane %v383, 2
      %v385 = vmax.f32 %v383, %v384
      %v386 = vrot.slane %v385, 1
      %v387 = vmax.f32 %v385, %v386
      %v390 = vcombine.low %v380, %v387
      %v392 = vunpack.c.l.s4 1983009808
      %v393 = vunpack.c.0.s8 %v392
      %v394 = vlaneseq
      %v395 = vshrl.u32 %v394, 7
      %v396 = vsub.s32 %v393, %v395
      %v397 = vrot.slane %v390, %v396
      %v399 = vsub.f32 %v361, %v397
      %v400 = vmul.f32 %v399, 1.442695
      %v401 = vpow.pop %v400
      %v404 = vunpack.c.l.s4 1983009808
      %v405 = vunpack.c.0.s8 %v404
      %v406 = vlaneseq
      %v407 = vshrl.u32 %v406, 7
      %v408 = vsub.s32 %v405, %v407
      %v409 = vrot.slane %v401, %v408
      %v410 = vcombine.high %v409, %v409
      %v413 = vsel %vm373, %v409, 0.0
      %v414 = vrot.slane %v413, 4
      %v415 = vadd.f32 %v413, %v414
      %v416 = vrot.slane %v415, 2
      %v417 = vadd.f32 %v415, %v416
      %v418 = vrot.slane %v417, 1
      %v419 = vadd.f32 %v417, %v418
      %v420 = vsel %vm373, %v410, 0.0
      %v421 = vrot.slane %v420, 4
      %v422 = vadd.f32 %v420, %v421
      %v423 = vrot.slane %v422, 2
      %v424 = vadd.f32 %v422, %v423
      %v425 = vrot.slane %v424, 1
      %v426 = vadd.f32 %v424, %v425
      %v429 = vcombine.low %v419, %v426
      %v431 = vunpack.c.l.s4 1983009808
      %v432 = vunpack.c.0.s8 %v431
      %v433 = vlaneseq
      %v434 = vshrl.u32 %v433, 7
      %v435 = vsub.s32 %v432, %v434
      %v436 = vrot.slane %v429, %v435
      %v437 = vrot.slane %v436, 7
      %v439 = vrcp.pop %v437
      %v440 = vmul.f32 %v401, %v439
      %v441 = vld [vmem:[%s3] sm:$0xff]
      %v442 = vld [vmem:[%s3 + $0x8] sm:$0xff]
      %v443 = vld [vmem:[%s3 + $0x10] sm:$0xff]
      %v444 = vld [vmem:[%s3 + $0x18] sm:$0xff]
      %v445 = vld [vmem:[%s4] sm:$0xff]
      %v446 = vld [vmem:[%s4 + $0x8] sm:$0xff]
      %v447 = vld [vmem:[%s4 + $0x10] sm:$0xff]
      %v448 = vld [vmem:[%s4 + $0x18] sm:$0xff]
      %450 = vset.pattern.permute.xlu0 0
      %451 = vperm.xlu0 %450, %v445
      %v452 = vpop.permute.xlu0 %451
      %455 = vset.pattern.permute.xlu0 0
      %456 = vperm.xlu0 %455, %v446
      %v457 = vpop.permute.xlu0 %456
      %460 = vset.pattern.permute.xlu0 0
      %461 = vperm.xlu0 %460, %v447
      %v462 = vpop.permute.xlu0 %461
      %465 = vset.pattern.permute.xlu0 0
      %466 = vperm.xlu0 %465, %v448
      %v467 = vpop.permute.xlu0 %466
      %vm469 = vcmask 261120
      %v471 = vsel %vm469, %v441, 0
      %v474 = vsel %vm469, %v442, 0
      %v477 = vsel %vm469, %v443, 0
      %v480 = vsel %vm469, %v444, 0
      %482 = vmatprep.subr.mxu0 0.0
      %483 = vmatpush1.msra.mxu0 0.0
      %484 = vmatprep.subr.mxu0 0.0
      %485 = vmatpush1.msra.mxu0 0.0
      %486 = vmatprep.subr.mxu0 0.0
      %487 = vmatpush1.msra.mxu0 0.0
      %488 = vmatprep.subr.mxu0 0.0
      %489 = vmatpush1.msra.mxu0 0.0
      %490 = vmatprep.subr.mxu0 0.0
      %491 = vmatpush1.msra.mxu0 0.0
      %492 = vmatprep.subr.mxu0 0.0
      %493 = vmatpush1.msra.mxu0 0.0
      %494 = vmatprep.subr.mxu0 0.0
      %495 = vmatpush1.msra.mxu0 0.0
      %496 = vmatprep.subr.mxu0 0.0
      %497 = vmatpush1.msra.mxu0 0.0
      %498 = vmatprep.subr.mxu0 0.0
      %499 = vmatpush1.msra.mxu0 0.0
      %500 = vmatprep.subr.mxu0 0.0
      %501 = vmatpush1.msra.mxu0 0.0
      %502 = vmatprep.subr.mxu0 0.0
      %503 = vmatpush1.msra.mxu0 0.0
      %504 = vmatprep.subr.mxu0 0.0
      %505 = vmatpush1.msra.mxu0 0.0
      %506 = vmatprep.subr.mxu0 %v360
      %507 = vmatpush1.msra.mxu0 %v359
      %508 = vmatprep.subr.mxu0 %v358
      %509 = vmatpush1.msra.mxu0 %v357
      %510 = vmatprep.subr.mxu0 %v356
      %511 = vmatpush1.msra.mxu0 %v355
      %512 = vmatprep.subr.mxu0 %v354
      %513 = vmatpush1.msra.mxu0 %v353
      %514 = vmatprep.subr.mxu0 0.0
      %515 = vmatpush2.msra.mxu0 0.0
      %516 = vmatprep.subr.mxu0 0.0
      %517 = vmatpush2.msra.mxu0 0.0
      %518 = vmatprep.subr.mxu0 0.0
      %519 = vmatpush2.msra.mxu0 0.0
      %520 = vmatprep.subr.mxu0 0.0
      %521 = vmatpush2.msra.mxu0 0.0
      %522 = vmatprep.subr.mxu0 0.0
      %523 = vmatpush2.msra.mxu0 0.0
      %524 = vmatprep.subr.mxu0 0.0
      %525 = vmatpush2.msra.mxu0 0.0
      %526 = vmatprep.subr.mxu0 0.0
      %527 = vmatpush2.msra.mxu0 0.0
      %528 = vmatprep.subr.mxu0 0.0
      %529 = vmatpush2.msra.mxu0 0.0
      %530 = vmatprep.subr.mxu0 0.0
      %531 = vmatpush2.msra.mxu0 0.0
      %532 = vmatprep.subr.mxu0 0.0
      %533 = vmatpush2.msra.mxu0 0.0
      %534 = vmatprep.subr.mxu0 0.0
      %535 = vmatpush2.msra.mxu0 0.0
      %536 = vmatprep.subr.mxu0 0.0
      %537 = vmatpush2.msra.mxu0 0.0
      %538 = vmatprep.subr.mxu0 0.0
      %539 = vmatpush2.msra.mxu0 0.0
      %540 = vmatprep.subr.mxu0 0.0
      %541 = vmatpush2.msra.mxu0 0.0
      %542 = vmatprep.subr.mxu0 0.0
      %543 = vmatpush2.msra.mxu0 0.0
      %544 = vmatprep.subr.mxu0 0.0
      %545 = vmatpush2.msra.mxu0 0.0
      %546 = vmatprep.mubr.f32.mxu0 0.0
      %547 = vmatmul.mubr.f32.gmra.mxu0 %v471
      %v548 = vpop.f32.mrf.mxu0
      %v549 = vadd.f32 %v452, %v548
      %v550 = vpop.f32.mrf.mxu0
      %v551 = vadd.f32 %v452, %v550
      %552 = vmatprep.mubr.f32.mxu0 0.0
      %553 = vmatmul.mubr.f32.gmra.mxu0 %v474
      %v554 = vpop.f32.mrf.mxu0
      %v555 = vadd.f32 %v457, %v554
      %v556 = vpop.f32.mrf.mxu0
      %v557 = vadd.f32 %v457, %v556
      %558 = vmatprep.mubr.f32.mxu0 0.0
      %559 = vmatmul.mubr.f32.gmra.mxu0 %v477
      %v560 = vpop.f32.mrf.mxu0
      %v561 = vadd.f32 %v462, %v560
      %v562 = vpop.f32.mrf.mxu0
      %v563 = vadd.f32 %v462, %v562
      %564 = vmatprep.mubr.f32.mxu0 0.0
      %565 = vmatmul.mubr.f32.gmra.mxu0 %v480
      %v566 = vpop.f32.mrf.mxu0
      %v567 = vadd.f32 %v467, %v566
      %v568 = vpop.f32.mrf.mxu0
      %v569 = vadd.f32 %v467, %v568
      %570 = vdwg.mxu0
      %v572 = vlaneseq
      %v573 = vshrl.u32 %v572, 7
      %v574 = vsub.s32 1, %v573
      %v575 = vrot.slane %v440, %v574
      %v576 = vlaneseq
      %v577 = vshrl.u32 %v576, 7
      %v578 = vsub.s32 3, %v577
      %v579 = vrot.slane %v440, %v578
      %v582 = vlaneseq
      %v583 = vshrl.u32 %v582, 7
      %v584 = vsub.s32 1, %v583
      %v585 = vrot.slane %v575, %v584
      %v586 = vlaneseq
      %v587 = vshrl.u32 %v586, 7
      %v588 = vsub.s32 1, %v587
      %v589 = vrot.slane %v579, %v588
      %v590 = vmul.f32 %v561, %v585
      %v591 = vmul.f32 %v563, %v589
      %v592 = vmul.f32 %v567, %v585
      %v593 = vmul.f32 %v569, %v589
      %v594 = vld [vmem:[%s2] sm:$0xff]
      %v595 = vld [vmem:[%s2 + $0x8] sm:$0xff]
      %v596 = vld [vmem:[%s2 + $0x10] sm:$0xff]
      %v597 = vld [vmem:[%s2 + $0x18] sm:$0xff]
      %598 = vmatprep.subr.mxu0 0.0
      %599 = vmatpush1.xpose.msra.mxu0 0.0
      %600 = vmatprep.subr.mxu0 0.0
      %601 = vmatpush1.xpose.msra.mxu0 0.0
      %602 = vmatprep.subr.mxu0 0.0
      %603 = vmatpush1.xpose.msra.mxu0 0.0
      %604 = vmatprep.subr.mxu0 0.0
      %605 = vmatpush1.xpose.msra.mxu0 0.0
      %606 = vmatprep.subr.mxu0 0.0
      %607 = vmatpush1.xpose.msra.mxu0 0.0
      %608 = vmatprep.subr.mxu0 0.0
      %609 = vmatpush1.xpose.msra.mxu0 0.0
      %610 = vmatprep.subr.mxu0 0.0
      %611 = vmatpush1.xpose.msra.mxu0 0.0
      %612 = vmatprep.subr.mxu0 0.0
      %613 = vmatpush1.xpose.msra.mxu0 0.0
      %614 = vmatprep.subr.mxu0 0.0
      %615 = vmatpush1.xpose.msra.mxu0 0.0
      %616 = vmatprep.subr.mxu0 0.0
      %617 = vmatpush1.xpose.msra.mxu0 0.0
      %618 = vmatprep.subr.mxu0 0.0
      %619 = vmatpush1.xpose.msra.mxu0 0.0
      %620 = vmatprep.subr.mxu0 0.0
      %621 = vmatpush1.xpose.msra.mxu0 0.0
      %622 = vmatprep.subr.mxu0 0.0
      %623 = vmatpush1.xpose.msra.mxu0 0.0
      %624 = vmatprep.subr.mxu0 0.0
      %625 = vmatpush1.xpose.msra.mxu0 0.0
      %626 = vmatprep.subr.mxu0 %v597
      %627 = vmatpush1.xpose.msra.mxu0 %v596
      %628 = vmatprep.subr.mxu0 %v595
      %629 = vmatpush1.xpose.msra.mxu0 %v594
      %630 = vmatprep.subr.mxu0 0.0
      %631 = vmatpush2.xpose.msra.mxu0 0.0
      %632 = vmatprep.subr.mxu0 0.0
      %633 = vmatpush2.xpose.msra.mxu0 0.0
      %634 = vmatprep.subr.mxu0 0.0
      %635 = vmatpush2.xpose.msra.mxu0 0.0
      %636 = vmatprep.subr.mxu0 0.0
      %637 = vmatpush2.xpose.msra.mxu0 0.0
      %638 = vmatprep.subr.mxu0 0.0
      %639 = vmatpush2.xpose.msra.mxu0 0.0
      %640 = vmatprep.subr.mxu0 0.0
      %641 = vmatpush2.xpose.msra.mxu0 0.0
      %642 = vmatprep.subr.mxu0 0.0
      %643 = vmatpush2.xpose.msra.mxu0 0.0
      %644 = vmatprep.subr.mxu0 0.0
      %645 = vmatpush2.xpose.msra.mxu0 0.0
      %646 = vmatprep.subr.mxu0 0.0
      %647 = vmatpush2.xpose.msra.mxu0 0.0
      %648 = vmatprep.subr.mxu0 0.0
      %649 = vmatpush2.xpose.msra.mxu0 0.0
      %650 = vmatprep.subr.mxu0 0.0
      %651 = vmatpush2.xpose.msra.mxu0 0.0
      %652 = vmatprep.subr.mxu0 0.0
      %653 = vmatpush2.xpose.msra.mxu0 0.0
      %654 = vmatprep.subr.mxu0 0.0
      %655 = vmatpush2.xpose.msra.mxu0 0.0
      %656 = vmatprep.subr.mxu0 0.0
      %657 = vmatpush2.xpose.msra.mxu0 0.0
      %658 = vmatprep.subr.mxu0 0.0
      %659 = vmatpush2.xpose.msra.mxu0 0.0
      %660 = vmatprep.subr.mxu0 0.0
      %661 = vmatpush2.xpose.msra.mxu0 0.0
      %662 = vmatprep.mubr.f32.mxu0 %v591
      %663 = vmatmul.mubr.f32.gmra.mxu0 %v590
      %v664 = vpop.f32.mrf.mxu0
      %v665 = vadd.f32 0.0, %v664
      %v666 = vpop.f32.mrf.mxu0
      %667 = vmatprep.mubr.f32.mxu0 %v593
      %668 = vmatmul.mubr.f32.gmra.mxu0 %v592
      %v669 = vpop.f32.mrf.mxu0
      %v670 = vadd.f32 0.0, %v669
      %v671 = vpop.f32.mrf.mxu0
      %672 = vdwg.mxu0
      %673 = vxpose.xlu0.b32.start [1/16] %v665, 128
      %674 = vxpose.xlu0.b32.cont [2/16] %v670, 128
      %675 = vxpose.xlu0.b32.cont [3/16] 0.0, 128
      %676 = vxpose.xlu0.b32.cont [4/16] 0.0, 128
      %677 = vxpose.xlu0.b32.cont [5/16] 0.0, 128
      %678 = vxpose.xlu0.b32.cont [6/16] 0.0, 128
      %679 = vxpose.xlu0.b32.cont [7/16] 0.0, 128
      %680 = vxpose.xlu0.b32.cont [8/16] 0.0, 128
      %681 = vxpose.xlu0.b32.cont [9/16] 0.0, 128
      %682 = vxpose.xlu0.b32.cont [10/16] 0.0, 128
      %683 = vxpose.xlu0.b32.cont [11/16] 0.0, 128
      %684 = vxpose.xlu0.b32.cont [12/16] 0.0, 128
      %685 = vxpose.xlu0.b32.cont [13/16] 0.0, 128
      %686 = vxpose.xlu0.b32.cont [14/16] 0.0, 128
      %687 = vxpose.xlu0.b32.cont [15/16] 0.0, 128
      %688 = vxpose.xlu0.b32.end [16/16] 0.0, 128
      %v689 = vpop.trf.xlu0
      %v690 = vpop.trf.xlu0
      %v691 = vpop.trf.xlu0
      %v692 = vpop.trf.xlu0
      %v693 = vpop.trf.xlu0
      %v694 = vpop.trf.xlu0
      %v695 = vpop.trf.xlu0
      %v696 = vpop.trf.xlu0
      %v697 = vpop.trf.xlu0
      %v698 = vpop.trf.xlu0
      %v699 = vpop.trf.xlu0
      %v700 = vpop.trf.xlu0
      %v701 = vpop.trf.xlu0
      %v702 = vpop.trf.xlu0
      %v703 = vpop.trf.xlu0
      %v704 = vpop.trf.xlu0
      %vm705 = vcmask 130048
      %v707 = vsel %vm705, %v689, 0
      %v710 = vsel %vm705, %v690, 0
      %712 = vmatprep.subr.mxu0 0.0
      %713 = vmatpush1.msra.mxu0 0.0
      %714 = vmatprep.subr.mxu0 0.0
      %715 = vmatpush1.msra.mxu0 0.0
      %716 = vmatprep.subr.mxu0 0.0
      %717 = vmatpush1.msra.mxu0 0.0
      %718 = vmatprep.subr.mxu0 0.0
      %719 = vmatpush1.msra.mxu0 0.0
      %720 = vmatprep.subr.mxu0 0.0
      %721 = vmatpush1.msra.mxu0 0.0
      %722 = vmatprep.subr.mxu0 0.0
      %723 = vmatpush1.msra.mxu0 0.0
      %724 = vmatprep.subr.mxu0 0.0
      %725 = vmatpush1.msra.mxu0 0.0
      %726 = vmatprep.subr.mxu0 0.0
      %727 = vmatpush1.msra.mxu0 0.0
      %728 = vmatprep.subr.mxu0 0.0
      %729 = vmatpush1.msra.mxu0 0.0
      %730 = vmatprep.subr.mxu0 0.0
      %731 = vmatpush1.msra.mxu0 0.0
      %732 = vmatprep.subr.mxu0 0.0
      %733 = vmatpush1.msra.mxu0 0.0
      %734 = vmatprep.subr.mxu0 0.0
      %735 = vmatpush1.msra.mxu0 0.0
      %736 = vmatprep.subr.mxu0 0.0
      %737 = vmatpush1.msra.mxu0 0.0
      %738 = vmatprep.subr.mxu0 0.0
      %739 = vmatpush1.msra.mxu0 0.0
      %740 = vmatprep.subr.mxu0 %v569
      %741 = vmatpush1.msra.mxu0 %v567
      %742 = vmatprep.subr.mxu0 %v563
      %743 = vmatpush1.msra.mxu0 %v561
      %744 = vmatprep.subr.mxu0 0.0
      %745 = vmatpush2.msra.mxu0 0.0
      %746 = vmatprep.subr.mxu0 0.0
      %747 = vmatpush2.msra.mxu0 0.0
      %748 = vmatprep.subr.mxu0 0.0
      %749 = vmatpush2.msra.mxu0 0.0
      %750 = vmatprep.subr.mxu0 0.0
      %751 = vmatpush2.msra.mxu0 0.0
      %752 = vmatprep.subr.mxu0 0.0
      %753 = vmatpush2.msra.mxu0 0.0
      %754 = vmatprep.subr.mxu0 0.0
      %755 = vmatpush2.msra.mxu0 0.0
      %756 = vmatprep.subr.mxu0 0.0
      %757 = vmatpush2.msra.mxu0 0.0
      %758 = vmatprep.subr.mxu0 0.0
      %759 = vmatpush2.msra.mxu0 0.0
      %760 = vmatprep.subr.mxu0 0.0
      %761 = vmatpush2.msra.mxu0 0.0
      %762 = vmatprep.subr.mxu0 0.0
      %763 = vmatpush2.msra.mxu0 0.0
      %764 = vmatprep.subr.mxu0 0.0
      %765 = vmatpush2.msra.mxu0 0.0
      %766 = vmatprep.subr.mxu0 0.0
      %767 = vmatpush2.msra.mxu0 0.0
      %768 = vmatprep.subr.mxu0 0.0
      %769 = vmatpush2.msra.mxu0 0.0
      %770 = vmatprep.subr.mxu0 0.0
      %771 = vmatpush2.msra.mxu0 0.0
      %772 = vmatprep.subr.mxu0 0.0
      %773 = vmatpush2.msra.mxu0 0.0
      %774 = vmatprep.subr.mxu0 0.0
      %775 = vmatpush2.msra.mxu0 0.0
      %776 = vmatprep.mubr.f32.mxu0 0.0
      %777 = vmatmul.mubr.f32.gmra.mxu0 %v707
      %v778 = vpop.f32.mrf.mxu0
      %v779 = vadd.f32 0.0, %v778
      %v780 = vpop.f32.mrf.mxu0
      %v781 = vadd.f32 0.0, %v780
      %782 = vmatprep.mubr.f32.mxu0 0.0
      %783 = vmatmul.mubr.f32.gmra.mxu0 %v710
      %v784 = vpop.f32.mrf.mxu0
      %v785 = vadd.f32 0.0, %v784
      %v786 = vpop.f32.mrf.mxu0
      %v787 = vadd.f32 0.0, %v786
      %788 = vdwg.mxu0
      %v789 = vmax.f32 %v779, %v785
      %v790 = vrot.slane %v789, 4
      %v791 = vmax.f32 %v789, %v790
      %v792 = vrot.slane %v791, 2
      %v793 = vmax.f32 %v791, %v792
      %v794 = vrot.slane %v793, 1
      %v795 = vmax.f32 %v793, %v794
      %v796 = vmax.f32 %v781, %v787
      %v797 = vrot.slane %v796, 4
      %v798 = vmax.f32 %v796, %v797
      %v799 = vrot.slane %v798, 2
      %v800 = vmax.f32 %v798, %v799
      %v801 = vrot.slane %v800, 1
      %v802 = vmax.f32 %v800, %v801
      %v803 = vsub.f32 %v779, %v795
      %v804 = vsub.f32 %v781, %v802
      %v805 = vsub.f32 %v785, %v795
      %v806 = vsub.f32 %v787, %v802
      %v807 = vmul.f32 %v803, 1.442695
      %v808 = vpow.pop %v807
      %v809 = vmul.f32 %v804, 1.442695
      %v810 = vpow.pop %v809
      %v811 = vmul.f32 %v805, 1.442695
      %v812 = vpow.pop %v811
      %v813 = vmul.f32 %v806, 1.442695
      %v814 = vpow.pop %v813
      %v815 = vadd.f32 %v808, %v812
      %v816 = vrot.slane %v815, 4
      %v817 = vadd.f32 %v815, %v816
      %v818 = vrot.slane %v817, 2
      %v819 = vadd.f32 %v817, %v818
      %v820 = vrot.slane %v819, 1
      %v821 = vadd.f32 %v819, %v820
      %v822 = vadd.f32 %v810, %v814
      %v823 = vrot.slane %v822, 4
      %v824 = vadd.f32 %v822, %v823
      %v825 = vrot.slane %v824, 2
      %v826 = vadd.f32 %v824, %v825
      %v827 = vrot.slane %v826, 1
      %v828 = vadd.f32 %v826, %v827
      %v829 = vrcp.pop %v821
      %v830 = vmul.f32 %v808, %v829
      %v831 = vrcp.pop %v828
      %v832 = vmul.f32 %v810, %v831
      %v833 = vmul.f32 %v812, %v829
      %v834 = vmul.f32 %v814, %v831
      %835 = vmatprep.subr.mxu0 0.0
      %836 = vmatpush1.xpose.msra.mxu0 0.0
      %837 = vmatprep.subr.mxu0 0.0
      %838 = vmatpush1.xpose.msra.mxu0 0.0
      %839 = vmatprep.subr.mxu0 0.0
      %840 = vmatpush1.xpose.msra.mxu0 0.0
      %841 = vmatprep.subr.mxu0 0.0
      %842 = vmatpush1.xpose.msra.mxu0 0.0
      %843 = vmatprep.subr.mxu0 0.0
      %844 = vmatpush1.xpose.msra.mxu0 0.0
      %845 = vmatprep.subr.mxu0 0.0
      %846 = vmatpush1.xpose.msra.mxu0 0.0
      %847 = vmatprep.subr.mxu0 0.0
      %848 = vmatpush1.xpose.msra.mxu0 0.0
      %849 = vmatprep.subr.mxu0 0.0
      %850 = vmatpush1.xpose.msra.mxu0 0.0
      %851 = vmatprep.subr.mxu0 0.0
      %852 = vmatpush1.xpose.msra.mxu0 0.0
      %853 = vmatprep.subr.mxu0 0.0
      %854 = vmatpush1.xpose.msra.mxu0 0.0
      %855 = vmatprep.subr.mxu0 0.0
      %856 = vmatpush1.xpose.msra.mxu0 0.0
      %857 = vmatprep.subr.mxu0 0.0
      %858 = vmatpush1.xpose.msra.mxu0 0.0
      %859 = vmatprep.subr.mxu0 0.0
      %860 = vmatpush1.xpose.msra.mxu0 0.0
      %861 = vmatprep.subr.mxu0 0.0
      %862 = vmatpush1.xpose.msra.mxu0 0.0
      %863 = vmatprep.subr.mxu0 %v834
      %864 = vmatpush1.xpose.msra.mxu0 %v833
      %865 = vmatprep.subr.mxu0 %v832
      %866 = vmatpush1.xpose.msra.mxu0 %v830
      %867 = vmatprep.subr.mxu0 0.0
      %868 = vmatpush2.xpose.msra.mxu0 0.0
      %869 = vmatprep.subr.mxu0 0.0
      %870 = vmatpush2.xpose.msra.mxu0 0.0
      %871 = vmatprep.subr.mxu0 0.0
      %872 = vmatpush2.xpose.msra.mxu0 0.0
      %873 = vmatprep.subr.mxu0 0.0
      %874 = vmatpush2.xpose.msra.mxu0 0.0
      %875 = vmatprep.subr.mxu0 0.0
      %876 = vmatpush2.xpose.msra.mxu0 0.0
      %877 = vmatprep.subr.mxu0 0.0
      %878 = vmatpush2.xpose.msra.mxu0 0.0
      %879 = vmatprep.subr.mxu0 0.0
      %880 = vmatpush2.xpose.msra.mxu0 0.0
      %881 = vmatprep.subr.mxu0 0.0
      %882 = vmatpush2.xpose.msra.mxu0 0.0
      %883 = vmatprep.subr.mxu0 0.0
      %884 = vmatpush2.xpose.msra.mxu0 0.0
      %885 = vmatprep.subr.mxu0 0.0
      %886 = vmatpush2.xpose.msra.mxu0 0.0
      %887 = vmatprep.subr.mxu0 0.0
      %888 = vmatpush2.xpose.msra.mxu0 0.0
      %889 = vmatprep.subr.mxu0 0.0
      %890 = vmatpush2.xpose.msra.mxu0 0.0
      %891 = vmatprep.subr.mxu0 0.0
      %892 = vmatpush2.xpose.msra.mxu0 0.0
      %893 = vmatprep.subr.mxu0 0.0
      %894 = vmatpush2.xpose.msra.mxu0 0.0
      %895 = vmatprep.subr.mxu0 0.0
      %896 = vmatpush2.xpose.msra.mxu0 0.0
      %897 = vmatprep.subr.mxu0 0.0
      %898 = vmatpush2.xpose.msra.mxu0 0.0
      %899 = vmatprep.mubr.f32.mxu0 %v551
      %900 = vmatmul.mubr.f32.gmra.mxu0 %v549
      %v901 = vpop.f32.mrf.mxu0
      %v902 = vadd.f32 0.0, %v901
      %v903 = vpop.f32.mrf.mxu0
      %904 = vmatprep.mubr.f32.mxu0 %v557
      %905 = vmatmul.mubr.f32.gmra.mxu0 %v555
      %v906 = vpop.f32.mrf.mxu0
      %v907 = vadd.f32 0.0, %v906
      %v908 = vpop.f32.mrf.mxu0
      %909 = vdwg.mxu0
      %v910 = vld [vmem:[%s5] sm:$0xff]
      %v911 = vld [vmem:[%s5 + $0x8] sm:$0xff]
      %v912 = vld [vmem:[%s6] sm:$0x1]
      %v914 = vlaneseq
      %v915 = vshrl.u32 %v914, 7
      %v916 = vsub.s32 0, %v915
      %v917 = vrot.slane %v912, %v916
      %v920 = vsel %vm705, %v902, 0
      %v923 = vsel %vm705, %v907, 0
      %v926 = vsel %vm705, %v910, 0
      %v929 = vsel %vm705, %v911, 0
      %931 = vmatprep.subr.mxu0 0.0
      %932 = vmatpush1.xpose.msra.mxu0 0.0
      %933 = vmatprep.subr.mxu0 0.0
      %934 = vmatpush1.xpose.msra.mxu0 0.0
      %935 = vmatprep.subr.mxu0 0.0
      %936 = vmatpush1.xpose.msra.mxu0 0.0
      %937 = vmatprep.subr.mxu0 0.0
      %938 = vmatpush1.xpose.msra.mxu0 0.0
      %939 = vmatprep.subr.mxu0 0.0
      %940 = vmatpush1.xpose.msra.mxu0 0.0
      %941 = vmatprep.subr.mxu0 0.0
      %942 = vmatpush1.xpose.msra.mxu0 0.0
      %943 = vmatprep.subr.mxu0 0.0
      %944 = vmatpush1.xpose.msra.mxu0 0.0
      %945 = vmatprep.subr.mxu0 0.0
      %946 = vmatpush1.xpose.msra.mxu0 0.0
      %947 = vmatprep.subr.mxu0 0.0
      %948 = vmatpush1.xpose.msra.mxu0 0.0
      %949 = vmatprep.subr.mxu0 0.0
      %950 = vmatpush1.xpose.msra.mxu0 0.0
      %951 = vmatprep.subr.mxu0 0.0
      %952 = vmatpush1.xpose.msra.mxu0 0.0
      %953 = vmatprep.subr.mxu0 0.0
      %954 = vmatpush1.xpose.msra.mxu0 0.0
      %955 = vmatprep.subr.mxu0 0.0
      %956 = vmatpush1.xpose.msra.mxu0 0.0
      %957 = vmatprep.subr.mxu0 0.0
      %958 = vmatpush1.xpose.msra.mxu0 0.0
      %959 = vmatprep.subr.mxu0 0.0
      %960 = vmatpush1.xpose.msra.mxu0 %v929
      %961 = vmatprep.subr.mxu0 0.0
      %962 = vmatpush1.xpose.msra.mxu0 %v926
      %963 = vmatprep.subr.mxu0 0.0
      %964 = vmatpush2.xpose.msra.mxu0 0.0
      %965 = vmatprep.subr.mxu0 0.0
      %966 = vmatpush2.xpose.msra.mxu0 0.0
      %967 = vmatprep.subr.mxu0 0.0
      %968 = vmatpush2.xpose.msra.mxu0 0.0
      %969 = vmatprep.subr.mxu0 0.0
      %970 = vmatpush2.xpose.msra.mxu0 0.0
      %971 = vmatprep.subr.mxu0 0.0
      %972 = vmatpush2.xpose.msra.mxu0 0.0
      %973 = vmatprep.subr.mxu0 0.0
      %974 = vmatpush2.xpose.msra.mxu0 0.0
      %975 = vmatprep.subr.mxu0 0.0
      %976 = vmatpush2.xpose.msra.mxu0 0.0
      %977 = vmatprep.subr.mxu0 0.0
      %978 = vmatpush2.xpose.msra.mxu0 0.0
      %979 = vmatprep.subr.mxu0 0.0
      %980 = vmatpush2.xpose.msra.mxu0 0.0
      %981 = vmatprep.subr.mxu0 0.0
      %982 = vmatpush2.xpose.msra.mxu0 0.0
      %983 = vmatprep.subr.mxu0 0.0
      %984 = vmatpush2.xpose.msra.mxu0 0.0
      %985 = vmatprep.subr.mxu0 0.0
      %986 = vmatpush2.xpose.msra.mxu0 0.0
      %987 = vmatprep.subr.mxu0 0.0
      %988 = vmatpush2.xpose.msra.mxu0 0.0
      %989 = vmatprep.subr.mxu0 0.0
      %990 = vmatpush2.xpose.msra.mxu0 0.0
      %991 = vmatprep.subr.mxu0 0.0
      %992 = vmatpush2.xpose.msra.mxu0 0.0
      %993 = vmatprep.subr.mxu0 0.0
      %994 = vmatpush2.xpose.msra.mxu0 0.0
      %995 = vmatprep.mubr.f32.mxu0 0.0
      %996 = vmatmul.mubr.f32.gmra.mxu0 %v920
      %v997 = vpop.f32.mrf.mxu0
      %v998 = vadd.f32 %v917, %v997
      %v999 = vpop.f32.mrf.mxu0
      %1000 = vmatprep.mubr.f32.mxu0 0.0
      %1001 = vmatmul.mubr.f32.gmra.mxu0 %v923
      %v1002 = vpop.f32.mrf.mxu0
      %v1003 = vadd.f32 %v917, %v1002
      %v1004 = vpop.f32.mrf.mxu0
      %1005 = vdwg.mxu0
      %v1006 = vsub.f32 %v998, %v902
      %v1007 = vsub.f32 %v1003, %v907
      %v1008 = vld [vmem:[%s7] sm:$0xff]
      %v1009 = vld [vmem:[%s7 + $0x8] sm:$0xff]
      %v1011 = vsel %vm705, %v1008, 0
      %v1014 = vsel %vm705, %v1009, 0
      %1016 = vmatprep.subr.mxu0 0.0
      %1017 = vmatpush1.msra.mxu0 0.0
      %1018 = vmatprep.subr.mxu0 0.0
      %1019 = vmatpush1.msra.mxu0 0.0
      %1020 = vmatprep.subr.mxu0 0.0
      %1021 = vmatpush1.msra.mxu0 0.0
      %1022 = vmatprep.subr.mxu0 0.0
      %1023 = vmatpush1.msra.mxu0 0.0
      %1024 = vmatprep.subr.mxu0 0.0
      %1025 = vmatpush1.msra.mxu0 0.0
      %1026 = vmatprep.subr.mxu0 0.0
      %1027 = vmatpush1.msra.mxu0 0.0
      %1028 = vmatprep.subr.mxu0 0.0
      %1029 = vmatpush1.msra.mxu0 0.0
      %1030 = vmatprep.subr.mxu0 0.0
      %1031 = vmatpush1.msra.mxu0 0.0
      %1032 = vmatprep.subr.mxu0 0.0
      %1033 = vmatpush1.msra.mxu0 0.0
      %1034 = vmatprep.subr.mxu0 0.0
      %1035 = vmatpush1.msra.mxu0 0.0
      %1036 = vmatprep.subr.mxu0 0.0
      %1037 = vmatpush1.msra.mxu0 0.0
      %1038 = vmatprep.subr.mxu0 0.0
      %1039 = vmatpush1.msra.mxu0 0.0
      %1040 = vmatprep.subr.mxu0 0.0
      %1041 = vmatpush1.msra.mxu0 0.0
      %1042 = vmatprep.subr.mxu0 0.0
      %1043 = vmatpush1.msra.mxu0 0.0
      %1044 = vmatprep.subr.mxu0 0.0
      %1045 = vmatpush1.msra.mxu0 %v1007
      %1046 = vmatprep.subr.mxu0 0.0
      %1047 = vmatpush1.msra.mxu0 %v1006
      %1048 = vmatprep.subr.mxu0 0.0
      %1049 = vmatpush2.msra.mxu0 0.0
      %1050 = vmatprep.subr.mxu0 0.0
      %1051 = vmatpush2.msra.mxu0 0.0
      %1052 = vmatprep.subr.mxu0 0.0
      %1053 = vmatpush2.msra.mxu0 0.0
      %1054 = vmatprep.subr.mxu0 0.0
      %1055 = vmatpush2.msra.mxu0 0.0
      %1056 = vmatprep.subr.mxu0 0.0
      %1057 = vmatpush2.msra.mxu0 0.0
      %1058 = vmatprep.subr.mxu0 0.0
      %1059 = vmatpush2.msra.mxu0 0.0
      %1060 = vmatprep.subr.mxu0 0.0
      %1061 = vmatpush2.msra.mxu0 0.0
      %1062 = vmatprep.subr.mxu0 0.0
      %1063 = vmatpush2.msra.mxu0 0.0
      %1064 = vmatprep.subr.mxu0 0.0
      %1065 = vmatpush2.msra.mxu0 0.0
      %1066 = vmatprep.subr.mxu0 0.0
      %1067 = vmatpush2.msra.mxu0 0.0
      %1068 = vmatprep.subr.mxu0 0.0
      %1069 = vmatpush2.msra.mxu0 0.0
      %1070 = vmatprep.subr.mxu0 0.0
      %1071 = vmatpush2.msra.mxu0 0.0
      %1072 = vmatprep.subr.mxu0 0.0
      %1073 = vmatpush2.msra.mxu0 0.0
      %1074 = vmatprep.subr.mxu0 0.0
      %1075 = vmatpush2.msra.mxu0 0.0
      %1076 = vmatprep.subr.mxu0 0.0
      %1077 = vmatpush2.msra.mxu0 0.0
      %1078 = vmatprep.subr.mxu0 0.0
      %1079 = vmatpush2.msra.mxu0 0.0
      %1080 = vmatprep.mubr.f32.mxu0 0.0
      %1081 = vmatmul.mubr.f32.gmra.mxu0 %v1011
      %v1082 = vpop.f32.mrf.mxu0
      %v1083 = vadd.f32 0.0, %v1082
      %v1084 = vpop.f32.mrf.mxu0
      %1085 = vmatprep.mubr.f32.mxu0 0.0
      %1086 = vmatmul.mubr.f32.gmra.mxu0 %v1014
      %v1087 = vpop.f32.mrf.mxu0
      %v1088 = vadd.f32 0.0, %v1087
      %v1089 = vpop.f32.mrf.mxu0
      %1090 = vdwg.mxu0
      %v1091 = vmax.f32 %v1083, 0.0
      %v1092 = vmax.f32 %v1088, 0.0
      %v1094 = vsel %vm705, %v1091, 0
      %v1097 = vsel %vm705, %v1092, 0
      %1099 = vmatprep.subr.mxu0 0.0
      %1100 = vmatpush1.msra.mxu0 0.0
      %1101 = vmatprep.subr.mxu0 0.0
      %1102 = vmatpush1.msra.mxu0 0.0
      %1103 = vmatprep.subr.mxu0 0.0
      %1104 = vmatpush1.msra.mxu0 0.0
      %1105 = vmatprep.subr.mxu0 0.0
      %1106 = vmatpush1.msra.mxu0 0.0
      %1107 = vmatprep.subr.mxu0 0.0
      %1108 = vmatpush1.msra.mxu0 0.0
      %1109 = vmatprep.subr.mxu0 0.0
      %1110 = vmatpush1.msra.mxu0 0.0
      %1111 = vmatprep.subr.mxu0 0.0
      %1112 = vmatpush1.msra.mxu0 0.0
      %1113 = vmatprep.subr.mxu0 0.0
      %1114 = vmatpush1.msra.mxu0 0.0
      %1115 = vmatprep.subr.mxu0 0.0
      %1116 = vmatpush1.msra.mxu0 0.0
      %1117 = vmatprep.subr.mxu0 0.0
      %1118 = vmatpush1.msra.mxu0 0.0
      %1119 = vmatprep.subr.mxu0 0.0
      %1120 = vmatpush1.msra.mxu0 0.0
      %1121 = vmatprep.subr.mxu0 0.0
      %1122 = vmatpush1.msra.mxu0 0.0
      %1123 = vmatprep.subr.mxu0 0.0
      %1124 = vmatpush1.msra.mxu0 0.0
      %1125 = vmatprep.subr.mxu0 0.0
      %1126 = vmatpush1.msra.mxu0 0.0
      %1127 = vmatprep.subr.mxu0 %v834
      %1128 = vmatpush1.msra.mxu0 %v833
      %1129 = vmatprep.subr.mxu0 %v832
      %1130 = vmatpush1.msra.mxu0 %v830
      %1131 = vmatprep.subr.mxu0 0.0
      %1132 = vmatpush2.msra.mxu0 0.0
      %1133 = vmatprep.subr.mxu0 0.0
      %1134 = vmatpush2.msra.mxu0 0.0
      %1135 = vmatprep.subr.mxu0 0.0
      %1136 = vmatpush2.msra.mxu0 0.0
      %1137 = vmatprep.subr.mxu0 0.0
      %1138 = vmatpush2.msra.mxu0 0.0
      %1139 = vmatprep.subr.mxu0 0.0
      %1140 = vmatpush2.msra.mxu0 0.0
      %1141 = vmatprep.subr.mxu0 0.0
      %1142 = vmatpush2.msra.mxu0 0.0
      %1143 = vmatprep.subr.mxu0 0.0
      %1144 = vmatpush2.msra.mxu0 0.0
      %1145 = vmatprep.subr.mxu0 0.0
      %1146 = vmatpush2.msra.mxu0 0.0
      %1147 = vmatprep.subr.mxu0 0.0
      %1148 = vmatpush2.msra.mxu0 0.0
      %1149 = vmatprep.subr.mxu0 0.0
      %1150 = vmatpush2.msra.mxu0 0.0
      %1151 = vmatprep.subr.mxu0 0.0
      %1152 = vmatpush2.msra.mxu0 0.0
      %1153 = vmatprep.subr.mxu0 0.0
      %1154 = vmatpush2.msra.mxu0 0.0
      %1155 = vmatprep.subr.mxu0 0.0
      %1156 = vmatpush2.msra.mxu0 0.0
      %1157 = vmatprep.subr.mxu0 0.0
      %1158 = vmatpush2.msra.mxu0 0.0
      %1159 = vmatprep.subr.mxu0 0.0
      %1160 = vmatpush2.msra.mxu0 0.0
      %1161 = vmatprep.subr.mxu0 0.0
      %1162 = vmatpush2.msra.mxu0 0.0
      %1163 = vmatprep.mubr.f32.mxu0 0.0
      %1164 = vmatmul.mubr.f32.gmra.mxu0 %v1094
      %v1165 = vpop.f32.mrf.mxu0
      %v1166 = vadd.f32 0.0, %v1165
      %v1167 = vpop.f32.mrf.mxu0
      %v1168 = vadd.f32 0.0, %v1167
      %1169 = vmatprep.mubr.f32.mxu0 0.0
      %1170 = vmatmul.mubr.f32.gmra.mxu0 %v1097
      %v1171 = vpop.f32.mrf.mxu0
      %v1172 = vadd.f32 0.0, %v1171
      %v1173 = vpop.f32.mrf.mxu0
      %v1174 = vadd.f32 0.0, %v1173
      %1175 = vdwg.mxu0
      %v1176 = vld [vmem:[%s8] sm:$0xff]
      %v1177 = vld [vmem:[%s8 + $0x8] sm:$0xff]
      %v1178 = vld [vmem:[%s8 + $0x10] sm:$0xff]
      %v1179 = vld [vmem:[%s8 + $0x18] sm:$0xff]
      %v1181 = vsel %vm705, %v1176, 0
      %v1184 = vsel %vm705, %v1177, 0
      %v1187 = vsel %vm705, %v1178, 0
      %v1190 = vsel %vm705, %v1179, 0
      %1192 = vmatprep.subr.mxu0 0.0
      %1193 = vmatpush1.msra.mxu0 0.0
      %1194 = vmatprep.subr.mxu0 0.0
      %1195 = vmatpush1.msra.mxu0 0.0
      %1196 = vmatprep.subr.mxu0 0.0
      %1197 = vmatpush1.msra.mxu0 0.0
      %1198 = vmatprep.subr.mxu0 0.0
      %1199 = vmatpush1.msra.mxu0 0.0
      %1200 = vmatprep.subr.mxu0 0.0
      %1201 = vmatpush1.msra.mxu0 0.0
      %1202 = vmatprep.subr.mxu0 0.0
      %1203 = vmatpush1.msra.mxu0 0.0
      %1204 = vmatprep.subr.mxu0 0.0
      %1205 = vmatpush1.msra.mxu0 0.0
      %1206 = vmatprep.subr.mxu0 0.0
      %1207 = vmatpush1.msra.mxu0 0.0
      %1208 = vmatprep.subr.mxu0 0.0
      %1209 = vmatpush1.msra.mxu0 0.0
      %1210 = vmatprep.subr.mxu0 0.0
      %1211 = vmatpush1.msra.mxu0 0.0
      %1212 = vmatprep.subr.mxu0 0.0
      %1213 = vmatpush1.msra.mxu0 0.0
      %1214 = vmatprep.subr.mxu0 0.0
      %1215 = vmatpush1.msra.mxu0 0.0
      %1216 = vmatprep.subr.mxu0 0.0
      %1217 = vmatpush1.msra.mxu0 0.0
      %1218 = vmatprep.subr.mxu0 0.0
      %1219 = vmatpush1.msra.mxu0 0.0
      %1220 = vmatprep.subr.mxu0 %v1174
      %1221 = vmatpush1.msra.mxu0 %v1172
      %1222 = vmatprep.subr.mxu0 %v1168
      %1223 = vmatpush1.msra.mxu0 %v1166
      %1224 = vmatprep.subr.mxu0 0.0
      %1225 = vmatpush2.msra.mxu0 0.0
      %1226 = vmatprep.subr.mxu0 0.0
      %1227 = vmatpush2.msra.mxu0 0.0
      %1228 = vmatprep.subr.mxu0 0.0
      %1229 = vmatpush2.msra.mxu0 0.0
      %1230 = vmatprep.subr.mxu0 0.0
      %1231 = vmatpush2.msra.mxu0 0.0
      %1232 = vmatprep.subr.mxu0 0.0
      %1233 = vmatpush2.msra.mxu0 0.0
      %1234 = vmatprep.subr.mxu0 0.0
      %1235 = vmatpush2.msra.mxu0 0.0
      %1236 = vmatprep.subr.mxu0 0.0
      %1237 = vmatpush2.msra.mxu0 0.0
      %1238 = vmatprep.subr.mxu0 0.0
      %1239 = vmatpush2.msra.mxu0 0.0
      %1240 = vmatprep.subr.mxu0 0.0
      %1241 = vmatpush2.msra.mxu0 0.0
      %1242 = vmatprep.subr.mxu0 0.0
      %1243 = vmatpush2.msra.mxu0 0.0
      %1244 = vmatprep.subr.mxu0 0.0
      %1245 = vmatpush2.msra.mxu0 0.0
      %1246 = vmatprep.subr.mxu0 0.0
      %1247 = vmatpush2.msra.mxu0 0.0
      %1248 = vmatprep.subr.mxu0 0.0
      %1249 = vmatpush2.msra.mxu0 0.0
      %1250 = vmatprep.subr.mxu0 0.0
      %1251 = vmatpush2.msra.mxu0 0.0
      %1252 = vmatprep.subr.mxu0 0.0
      %1253 = vmatpush2.msra.mxu0 0.0
      %1254 = vmatprep.subr.mxu0 0.0
      %1255 = vmatpush2.msra.mxu0 0.0
      %1256 = vmatprep.mubr.f32.mxu0 0.0
      %1257 = vmatmul.mubr.f32.gmra.mxu0 %v1181
      %v1258 = vpop.f32.mrf.mxu0
      %v1259 = vadd.f32 0.0, %v1258
      %v1260 = vpop.f32.mrf.mxu0
      %v1261 = vadd.f32 0.0, %v1260
      %1262 = vmatprep.mubr.f32.mxu0 0.0
      %1263 = vmatmul.mubr.f32.gmra.mxu0 %v1184
      %v1264 = vpop.f32.mrf.mxu0
      %v1265 = vadd.f32 0.0, %v1264
      %v1266 = vpop.f32.mrf.mxu0
      %v1267 = vadd.f32 0.0, %v1266
      %1268 = vmatprep.mubr.f32.mxu0 0.0
      %1269 = vmatmul.mubr.f32.gmra.mxu0 %v1187
      %v1270 = vpop.f32.mrf.mxu0
      %v1271 = vadd.f32 0.0, %v1270
      %v1272 = vpop.f32.mrf.mxu0
      %v1273 = vadd.f32 0.0, %v1272
      %1274 = vmatprep.mubr.f32.mxu0 0.0
      %1275 = vmatmul.mubr.f32.gmra.mxu0 %v1190
      %v1276 = vpop.f32.mrf.mxu0
      %v1277 = vadd.f32 0.0, %v1276
      %v1278 = vpop.f32.mrf.mxu0
      %v1279 = vadd.f32 0.0, %v1278
      %1280 = vdwg.mxu0
      %v1281 = vadd.f32 %v353, %v1259
      %v1282 = vadd.f32 %v354, %v1261
      %v1283 = vadd.f32 %v355, %v1265
      %v1284 = vadd.f32 %v356, %v1267
      %v1285 = vadd.f32 %v357, %v1271
      %v1286 = vadd.f32 %v358, %v1273
      %v1287 = vadd.f32 %v359, %v1277
      %v1288 = vadd.f32 %v360, %v1279
      %1289 = vst [vmem:[%s352] sm:$0xff] %v1281
      %1290 = vst [vmem:[%s352 + $0x8] sm:$0xff] %v1282
      %1291 = vst [vmem:[%s352 + $0x10] sm:$0xff] %v1283
      %1292 = vst [vmem:[%s352 + $0x18] sm:$0xff] %v1284
      %1293 = vst [vmem:[%s352 + $0x20] sm:$0xff] %v1285
      %1294 = vst [vmem:[%s352 + $0x28] sm:$0xff] %v1286
      %1295 = vst [vmem:[%s352 + $0x30] sm:$0xff] %v1287
      %1296 = vst [vmem:[%s352 + $0x38] sm:$0xff] %v1288
      %p1297 = scmp.lt.s32.totalorder %s20, 1
      %s1298 = scalar_select %p1297, %s20, 1
      %s1299 = smul.addr %s1298, 8
      %s1300 = smul.addr %s1299, 8
      %s1301 = scalar_lea.vmem %s9, %s1300
      // Predicated region
      $region57: #{sam_forward_pallas.1} parent=55 // pred_check
        %p1302 = pneg %p237
      $region58: #{sam_forward_pallas.1} parent=55 // pred_check_branch
        %1304 = sbr.rel (%p1302) target = $region60
      $region59: #{sam_forward_pallas.1} parent=55 // pred_region
        _
      $region60: #{sam_forward_pallas.1} parent=55 // pred_fallthru
        _
    $region56: #{sam_forward_pallas.1} parent=5 // pred_fallthru
      _
    %p1305 = scmp.le.s32.totalorder 2, %s15
    // Predicated region
    $region61: #{sam_forward_pallas.1} parent=5 // pred_check
      %p1306 = pneg %p1305
    $region62: #{sam_forward_pallas.1} parent=5 // pred_check_branch
      %1308 = sbr.rel (%p1306) target = $region64
    $region63: #{sam_forward_pallas.1} parent=5 // pred_region
      %s1309 = ssub.s32 %s15, 2
      // Predicated region
      $region65: #{sam_forward_pallas.1} parent=63 // pred_check
        %p1310 = pneg %p243
      $region66: #{sam_forward_pallas.1} parent=63 // pred_check_branch
        %1312 = sbr.rel (%p1310) target = $region68
      $region67: #{sam_forward_pallas.1} parent=63 // pred_region
        %p1313 = scmp.lt.s32.totalorder %s21, 1
        %s1314 = scalar_select %p1313, %s21, 1
        %s1315 = smul.addr %s1314, 8
        %s1316 = smul.addr %s1315, 8
        %s1317 = scalar_lea.vmem %s9, %s1316
      $region68: #{sam_forward_pallas.1} parent=63 // pred_fallthru
        _
    $region64: #{sam_forward_pallas.1} parent=5 // pred_fallthru
      _
  $region6: #{sam_forward_pallas.1} parent=0 // loop_footer
    %s19 = sadd.s32 1, %s15
  $region7: #{sam_forward_pallas.1} parent=0 // loop_footer_branch
    %14 = sbr.rel target = $region3
  $region8: #{sam_forward_pallas.1} parent=0 // loop_exit
    _

</llo_original>
